<compile_context>
chip_gen: v6e
topology: v6e:2x2x1
jax: 0.10.0
libtpu: 0.0.40
codegen_flags: <defaults>
</compile_context>

<pallas_src>
import functools

import jax
import jax.numpy as jnp
import numpy as np
from jax import lax
from jax.experimental import pallas as pl
from jax.experimental.pallas import tpu as pltpu


def _cdiv(a, b):
    return -(-a // b)


def _projector_kernel(xyz_ref, col_ids_ref, stk_ref, feats_ref, mask_ref, acc_ref, *,
                      img_h, img_w, feat_h, feat_w, hw_chunk, mm_dtype):
    """One grid step == (camera, k-tile, hw-chunk).

    xyz_ref    : VMEM (1, tk, 3)        projected (x, y, z) of the BEV points (this tile)
    col_ids_ref: VMEM (tk, chunk) i32   grid-invariant lane indices 0..chunk-1
    stk_ref    : VMEM (1, chunk, 9c)    unfolded feature slab for this hw chunk
    feats_ref  : VMEM (1, tk, 9c)       sampled features, col index = g*c + ch
    mask_ref   : VMEM (1, tk, 1)        float validity mask (0/1)
    acc_ref    : VMEM (tk, 9c) f32      accumulator over hw chunks
    """
    ck = pl.program_id(2)
    nck = pl.num_programs(2)

    @pl.when(ck == 0)
    def _():
        acc_ref[...] = jnp.zeros_like(acc_ref)

    eps = 1e-5
    xyz = xyz_ref[0]                                  # (tk, 3) f32
    x = xyz[:, 0:1]
    y = xyz[:, 1:2]
    z = xyz[:, 2:3]
    zc = jnp.maximum(z, eps)
    xn = (x / zc) / img_w                             # width-normalized image coords
    yn = (y / zc) / img_h                             # height-normalized

    # grid_sample(nearest, align_corners=False): pixel = norm * size - 0.5, rounded.
    ixf = jnp.round(xn * feat_w - 0.5)
    iyf = jnp.round(yn * feat_h - 0.5)
    center_ok = ((ixf >= 0.0) & (ixf <= feat_w - 1.0) &
                 (iyf >= 0.0) & (iyf <= feat_h - 1.0))
    ix = jnp.clip(ixf, 0.0, feat_w - 1.0).astype(jnp.int32)
    iy = jnp.clip(iyf, 0.0, feat_h - 1.0).astype(jnp.int32)

    # Flat index into the h*w map, in int32 (exact for any feature-map size).
    # -1 sentinel (never matched) -> whole 3x3 patch zero (grid_sample 'zeros').
    flat = iy * feat_w + ix                           # (tk, 1) i32
    flat = jnp.where(center_ok, flat, -1)
    flat_local = flat - ck * hw_chunk                 # offset into this chunk

    # One-hot for this chunk only; iota comes from VMEM (vld slot has slack),
    # compare + cast fused into a single select.
    onehot = jnp.where(col_ids_ref[...] == flat_local,
                       jnp.array(1, mm_dtype), jnp.array(0, mm_dtype))   # (tk, chunk)

    # One MXU matmul per chunk: gathers all 9 offsets and all channels at once.
    acc_ref[...] += jnp.dot(onehot, stk_ref[0],
                            preferred_element_type=jnp.float32)

    @pl.when(ck == nck - 1)
    def _():
        feats_ref[0] = acc_ref[...].astype(feats_ref.dtype)
        valid = (z > eps) & (xn > 0.0) & (xn < 1.0) & (yn > 0.0) & (yn < 1.0)
        mask_ref[0] = valid.astype(mask_ref.dtype)


def unfold_bev_project(bev_grids, images, I, E, *, image_size,
                       grid_size=(3, 3), bev_height=-1.0,
                       matmul_dtype=None, k_tile=512, hw_tile=512,
                       vmem_limit_mb=48):
    """JAX/Pallas equivalent of UnfoldBEVProjector.forward.

    bev_grids: (3, Hb, Wb) f32
    images   : (b*n, c, h, w)  NCHW feature maps
    I        : (b, n, 3, 3)
    E        : (b, n, 4, 4)
    Returns (sample_feats (b, n, k, gh*gw, c), sample_mask (b, n, k, 1) bool).

    matmul_dtype: optional dtype for the MXU operands (e.g. jnp.bfloat16 for 2x-6x
      MXU throughput); default None keeps images.dtype (bf16 inputs -> exact fast
      path, f32 inputs -> exact slow path).
    k_tile / hw_tile: BEV-point and flat-pixel tile sizes (multiples of 128).
      v6e (128 MiB VMEM): k_tile=1024, hw_tile=1024-2048.  v7x (64 MiB): 256-512.
    """
    b, n = I.shape[:2]
    bn, c, h, w = images.shape
    gh, gw = grid_size
    ng = gh * gw
    ph, pw = gh // 2, gw // 2
    Hb, Wb = bev_grids.shape[1], bev_grids.shape[2]
    k = Hb * Wb

    mm_dtype = images.dtype if matmul_dtype is None else matmul_dtype

    # --- tiny glue: project BEV points with all cameras (4x4 math stays out of the
    #     kernel's scalar path) -------------------------------------------------------
    pts = bev_grids.reshape(3, k).astype(jnp.float32)
    pts = pts.at[2, :].set(bev_height)
    pts_h = jnp.concatenate([pts, jnp.ones((1, k), jnp.float32)], axis=0)   # (4, k)
    I4 = jnp.zeros((b, n, 4, 4), jnp.float32)
    I4 = I4.at[:, :, :3, :3].set(I.astype(jnp.float32))
    I4 = I4.at[:, :, 3, 3].set(1.0)
    P = jnp.einsum('bnij,bnjk->bnik', I4, E.astype(jnp.float32)).reshape(bn, 4, 4)
    xyz = jnp.einsum('bij,jk->bki', P[:, :3, :], pts_h)                     # (bn, k, 3)

    # --- lane/sublane-dense k tiles --------------------------------------------------
    k_tile = max(128, (k_tile // 128) * 128)
    tk = max(128, min(k_tile, 128 * _cdiv(k, 128)))
    k_pad = tk * _cdiv(k, tk)
    xyz = jnp.pad(xyz, ((0, 0), (0, k_pad - k), (0, 0)))

    # --- precompute the unfolded (3x3-shifted) feature map ONCE in the wrapper
    #     (hoists the per-tile rolls/concat/casts out of the grid loop) ---------------
    hw = h * w
    hw_tile = max(128, (hw_tile // 128) * 128)
    chunk = max(128, min(hw_tile, 128 * _cdiv(hw, 128)))
    hw_pad = chunk * _cdiv(hw, chunk)
    imgp = jnp.pad(images, ((0, 0), (0, 0), (ph, ph), (pw, pw)))            # zero border
    shifted = [imgp[:, :, i:i + h, j:j + w] for i in range(gh) for j in range(gw)]
    stacked = jnp.stack(shifted, axis=1)                                    # (bn,ng,c,h,w)
    stacked = stacked.transpose(0, 3, 4, 1, 2).reshape(bn, hw, ng * c)      # (bn,hw,9c)
    stacked = jnp.pad(stacked, ((0, 0), (0, hw_pad - hw), (0, 0))).astype(mm_dtype)

    # Grid-invariant lane indices for the one-hot (fetched into VMEM once).
    col_ids = lax.broadcasted_iota(jnp.int32, (tk, chunk), 1)

    nkt = k_pad // tk
    nck = hw_pad // chunk

    kernel = functools.partial(
        _projector_kernel,
        img_h=float(image_size[0]), img_w=float(image_size[1]),
        feat_h=h, feat_w=w, hw_chunk=chunk, mm_dtype=mm_dtype)

    feats, mask = pl.pallas_call(
        kernel,
        grid=(bn, nkt, nck),
        in_specs=[
            pl.BlockSpec((1, tk, 3), lambda cam, kt, ck: (cam, kt, 0)),       # points
            pl.BlockSpec((tk, chunk), lambda cam, kt, ck: (0, 0)),            # lane iota
            pl.BlockSpec((1, chunk, ng * c), lambda cam, kt, ck: (cam, ck, 0)),  # unfolded
        ],
        out_specs=[
            pl.BlockSpec((1, tk, ng * c), lambda cam, kt, ck: (cam, kt, 0)),
            pl.BlockSpec((1, tk, 1), lambda cam, kt, ck: (cam, kt, 0)),
        ],
        out_shape=[
            jax.ShapeDtypeStruct((bn, k_pad, ng * c), images.dtype),
            jax.ShapeDtypeStruct((bn, k_pad, 1), jnp.float32),
        ],
        scratch_shapes=[pltpu.VMEM((tk, ng * c), jnp.float32)],
        compiler_params=pltpu.CompilerParams(
            # cam / k-tile are independent (megacore-shardable); the hw-chunk
            # reduction carries the accumulator and must stay 'arbitrary'.
            dimension_semantics=("parallel", "parallel", "arbitrary"),
            vmem_limit_bytes=vmem_limit_mb * 1024 * 1024),
    )(xyz, col_ids, stacked)

    # Output is already (k, 9, c)-ordered: only a slice + reshape, no HBM transpose.
    sample_feats = feats[:, :k, :].reshape(b, n, k, ng, c)
    sample_mask = (mask[:, :k, 0] > 0.0).reshape(b, n, k, 1)
    return sample_feats, sample_mask


def _reference(bev_grids, images, I, E, image_size, grid_size, bev_height):
    """Pure-NumPy reference of UnfoldBEVProjector.forward (for the self-check)."""
    b, n = I.shape[:2]
    bn, c, h, w = images.shape
    gh, gw = grid_size
    ph, pw = gh // 2, gw // 2
    k = bev_grids.shape[1] * bev_grids.shape[2]
    eps = 1e-5

    bev = np.array(bev_grids, np.float32).reshape(3, k)
    bev[2, :] = bev_height
    pts = np.concatenate([bev, np.ones((1, k), np.float32)], 0)          # (4, k)
    I4 = np.zeros((b, n, 4, 4), np.float32)
    I4[:, :, :3, :3] = np.asarray(I, np.float32)
    I4[:, :, 3, 3] = 1.0
    P = (I4 @ np.asarray(E, np.float32)).reshape(bn, 4, 4)
    sp = np.einsum('bij,jk->bik', P, pts)                                # (bn, 4, k)
    x, y, z = sp[:, 0], sp[:, 1], sp[:, 2]
    zc = np.maximum(z, eps)
    xn = x / zc / image_size[1]
    yn = y / zc / image_size[0]
    mask = (z > eps) & (xn > 0) & (xn < 1) & (yn > 0) & (yn < 1)         # (bn, k)

    ix = np.rint(xn * w - 0.5).astype(np.int64)
    iy = np.rint(yn * h - 0.5).astype(np.int64)
    cok = (ix >= 0) & (ix <= w - 1) & (iy >= 0) & (iy <= h - 1)
    ixc = np.clip(ix, 0, w - 1)
    iyc = np.clip(iy, 0, h - 1)

    imgp = np.pad(np.asarray(images, np.float32),
                  ((0, 0), (0, 0), (ph, ph), (pw, pw)))
    bidx = np.arange(bn)[:, None]
    feats = np.zeros((bn, k, gh * gw, c), np.float32)
    for i in range(gh):
        for j in range(gw):
            val = imgp[bidx, :, iyc + i, ixc + j]                        # (bn, k, c)
            feats[:, :, i * gw + j, :] = val * cok[..., None]
    return feats.reshape(b, n, k, gh * gw, c), mask.reshape(b, n, k, 1)


if __name__ == "__main__":
    key = jax.random.PRNGKey(0)
    k1, k2, k3, k4 = jax.random.split(key, 4)

    b, n = 2, 2
    c, h, w = 8, 16, 16          # feature maps
    image_size = (32, 32)        # original image (height, width) used for normalization
    Hb, Wb = 8, 8                # BEV grid -> k = 64 points
    bn = b * n

    bev_grids = jax.random.uniform(k1, (3, Hb, Wb), jnp.float32, minval=-4.0, maxval=4.0)
    images = jax.random.normal(k2, (bn, c, h, w), jnp.float32)

    base_I = jnp.array([[20.0, 0.0, 16.0],
                        [0.0, 20.0, 16.0],
                        [0.0, 0.0, 1.0]], jnp.float32)
    I = jnp.broadcast_to(base_I, (b, n, 3, 3)) + 0.05 * jax.random.normal(
        k3, (b, n, 3, 3), jnp.float32)
    base_E = jnp.eye(4, dtype=jnp.float32).at[2, 3].set(6.0)
    E = jnp.broadcast_to(base_E, (b, n, 4, 4)) + 0.01 * jax.random.normal(
        k4, (b, n, 4, 4), jnp.float32)

    sample_feats, sample_mask = unfold_bev_project(
        bev_grids, images, I, E, image_size=image_size,
        grid_size=(3, 3), bev_height=-1.0)
    jax.block_until_ready((sample_feats, sample_mask))

    assert sample_feats.shape == (b, n, Hb * Wb, 9, c), sample_feats.shape
    assert sample_feats.dtype == images.dtype
    assert sample_mask.shape == (b, n, Hb * Wb, 1), sample_mask.shape
    assert sample_mask.dtype == jnp.bool_

    ref_feats, ref_mask = _reference(bev_grids, images, I, E, image_size, (3, 3), -1.0)
    np.testing.assert_allclose(np.asarray(sample_feats), ref_feats, rtol=1e-4, atol=1e-4)
    assert np.array_equal(np.asarray(sample_mask), ref_mask)
    print("KERNEL_OK")
</pallas_src>

<mosaic_0001>
module attributes {stable_mosaic.version = 11 : i64} {
  func.func @_projector_kernel(%arg0: i32, %arg1: i32, %arg2: i32, %arg3: memref<1x128x3xf32, #tpu.memory_space<vmem>>, %arg4: memref<128x256xi32, #tpu.memory_space<vmem>>, %arg5: memref<1x256x72xf32, #tpu.memory_space<vmem>>, %arg6: memref<1x128x72xf32, #tpu.memory_space<vmem>>, %arg7: memref<1x128x1xf32, #tpu.memory_space<vmem>>, %arg8: memref<128x72xf32, #tpu.memory_space<vmem>>) attributes {dimension_semantics = [#tpu.dimension_semantics<parallel>, #tpu.dimension_semantics<parallel>, #tpu.dimension_semantics<arbitrary>], iteration_bounds = array<i64: 4, 1, 1>, scalar_prefetch = 0 : i64, scratch_operands = 1 : i64, tpu.core_type = #tpu.core_type<tc>, window_params = [{transform_indices = @transform_0, window_bounds = array<i64: 1, 128, 3>}, {pipeline_mode = #tpu.pipeline_mode<synchronous>, transform_indices = @transform_1, window_bounds = array<i64: 128, 256>}, {transform_indices = @transform_2, window_bounds = array<i64: 1, 256, 72>}, {transform_indices = @transform_3, window_bounds = array<i64: 1, 128, 72>}, {transform_indices = @transform_4, window_bounds = array<i64: 1, 128, 1>}]} {
    %c0_i32 = arith.constant 0 : i32
    %0 = arith.cmpi eq, %arg2, %c0_i32 : i32
    %1 = arith.extui %0 : i1 to i32
    %c0_i32_0 = arith.constant 0 : i32
    %2 = arith.cmpi ne, %1, %c0_i32_0 : i32
    scf.if %2 {
      %cst_31 = arith.constant 0.000000e+00 : f32
      %70 = vector.broadcast %cst_31 : f32 to vector<128x72xf32>
      %c0_32 = arith.constant 0 : index
      %c0_33 = arith.constant 0 : index
      %71 = vector.load %arg8[%c0_32, %c0_33] : memref<128x72xf32, #tpu.memory_space<vmem>>, vector<128x72xf32>
      tpu.vector_store %arg8[%c0_32, %c0_33], %70 {strides = array<i32>} : memref<128x72xf32, #tpu.memory_space<vmem>>, vector<128x72xf32>,
    } else {
    }
    %c0 = arith.constant 0 : index
    %c0_1 = arith.constant 0 : index
    %c0_2 = arith.constant 0 : index
    %3 = vector.load %arg3[%c0, %c0_1, %c0_2] : memref<1x128x3xf32, #tpu.memory_space<vmem>>, vector<1x128x3xf32>
    %4 = vector.shape_cast %3 : vector<1x128x3xf32> to vector<128x3xf32>
    %5 = vector.extract_strided_slice %4 {offsets = [0, 0], sizes = [128, 1], strides = [1, 1]} : vector<128x3xf32> to vector<128x1xf32>
    %6 = vector.extract_strided_slice %4 {offsets = [0, 1], sizes = [128, 1], strides = [1, 1]} : vector<128x3xf32> to vector<128x1xf32>
    %7 = vector.extract_strided_slice %4 {offsets = [0, 2], sizes = [128, 1], strides = [1, 1]} : vector<128x3xf32> to vector<128x1xf32>
    %cst = arith.constant 9.99999974E-6 : f32
    %8 = vector.broadcast %cst : f32 to vector<128x1xf32>
    %9 = arith.maximumf %7, %8 : vector<128x1xf32>
    %10 = arith.divf %5, %9 : vector<128x1xf32>
    %cst_3 = arith.constant 3.200000e+01 : f32
    %11 = vector.broadcast %cst_3 : f32 to vector<128x1xf32>
    %12 = arith.divf %10, %11 : vector<128x1xf32>
    %13 = arith.divf %6, %9 : vector<128x1xf32>
    %cst_4 = arith.constant 3.200000e+01 : f32
    %14 = vector.broadcast %cst_4 : f32 to vector<128x1xf32>
    %15 = arith.divf %13, %14 : vector<128x1xf32>
    %cst_5 = arith.constant 1.600000e+01 : f32
    %16 = vector.broadcast %cst_5 : f32 to vector<128x1xf32>
    %17 = arith.mulf %12, %16 : vector<128x1xf32>
    %cst_6 = arith.constant 5.000000e-01 : f32
    %18 = vector.broadcast %cst_6 : f32 to vector<128x1xf32>
    %19 = arith.subf %17, %18 : vector<128x1xf32>
    %20 = math.roundeven %19 : vector<128x1xf32>
    %cst_7 = arith.constant 1.600000e+01 : f32
    %21 = vector.broadcast %cst_7 : f32 to vector<128x1xf32>
    %22 = arith.mulf %15, %21 : vector<128x1xf32>
    %cst_8 = arith.constant 5.000000e-01 : f32
    %23 = vector.broadcast %cst_8 : f32 to vector<128x1xf32>
    %24 = arith.subf %22, %23 : vector<128x1xf32>
    %25 = math.roundeven %24 : vector<128x1xf32>
    %cst_9 = arith.constant 0.000000e+00 : f32
    %26 = vector.broadcast %cst_9 : f32 to vector<128x1xf32>
    %27 = arith.cmpf oge, %20, %26 : vector<128x1xf32>
    %cst_10 = arith.constant 1.500000e+01 : f32
    %28 = vector.broadcast %cst_10 : f32 to vector<128x1xf32>
    %29 = arith.cmpf ole, %20, %28 : vector<128x1xf32>
    %30 = arith.andi %27, %29 : vector<128x1xi1>
    %cst_11 = arith.constant 0.000000e+00 : f32
    %31 = vector.broadcast %cst_11 : f32 to vector<128x1xf32>
    %32 = arith.cmpf oge, %25, %31 : vector<128x1xf32>
    %33 = arith.andi %30, %32 : vector<128x1xi1>
    %cst_12 = arith.constant 1.500000e+01 : f32
    %34 = vector.broadcast %cst_12 : f32 to vector<128x1xf32>
    %35 = arith.cmpf ole, %25, %34 : vector<128x1xf32>
    %36 = arith.andi %33, %35 : vector<128x1xi1>
    %cst_13 = arith.constant 0.000000e+00 : f32
    %cst_14 = arith.constant 1.500000e+01 : f32
    %37 = vector.broadcast %cst_13 : f32 to vector<128x1xf32>
    %38 = arith.maximumf %37, %20 : vector<128x1xf32>
    %39 = vector.broadcast %cst_14 : f32 to vector<128x1xf32>
    %40 = arith.minimumf %39, %38 : vector<128x1xf32>
    %41 = arith.fptosi %40 : vector<128x1xf32> to vector<128x1xi32>
    %cst_15 = arith.constant 0.000000e+00 : f32
    %cst_16 = arith.constant 1.500000e+01 : f32
    %42 = vector.broadcast %cst_15 : f32 to vector<128x1xf32>
    %43 = arith.maximumf %42, %25 : vector<128x1xf32>
    %44 = vector.broadcast %cst_16 : f32 to vector<128x1xf32>
    %45 = arith.minimumf %44, %43 : vector<128x1xf32>
    %46 = arith.fptosi %45 : vector<128x1xf32> to vector<128x1xi32>
    %c16_i32 = arith.constant 16 : i32
    %47 = vector.broadcast %c16_i32 : i32 to vector<128x1xi32>
    %48 = arith.muli %46, %47 : vector<128x1xi32>
    %49 = arith.addi %48, %41 : vector<128x1xi32>
    %c-1_i32 = arith.constant -1 : i32
    %50 = vector.broadcast %c-1_i32 : i32 to vector<128x1xi32>
    %51 = arith.select %36, %49, %50 : vector<128x1xi1>, vector<128x1xi32>
    %c256_i32 = arith.constant 256 : i32
    %52 = arith.muli %arg2, %c256_i32 : i32
    %53 = vector.broadcast %52 : i32 to vector<128x1xi32>
    %54 = arith.subi %51, %53 : vector<128x1xi32>
    %c0_17 = arith.constant 0 : index
    %c0_18 = arith.constant 0 : index
    %55 = vector.load %arg4[%c0_17, %c0_18] : memref<128x256xi32, #tpu.memory_space<vmem>>, vector<128x256xi32>
    %56 = vector.broadcast %54 : vector<128x1xi32> to vector<128x256xi32>
    %57 = arith.cmpi eq, %55, %56 : vector<128x256xi32>
    %cst_19 = arith.constant 1.000000e+00 : f32
    %cst_20 = arith.constant 0.000000e+00 : f32
    %58 = vector.broadcast %cst_19 : f32 to vector<128x256xf32>
    %59 = vector.broadcast %cst_20 : f32 to vector<128x256xf32>
    %60 = arith.select %57, %58, %59 : vector<128x256xi1>, vector<128x256xf32>
    %c0_21 = arith.constant 0 : index
    %c0_22 = arith.constant 0 : index
    %61 = vector.load %arg8[%c0_21, %c0_22] : memref<128x72xf32, #tpu.memory_space<vmem>>, vector<128x72xf32>
    %c0_23 = arith.constant 0 : index
    %c0_24 = arith.constant 0 : index
    %c0_25 = arith.constant 0 : index
    %62 = vector.load %arg5[%c0_23, %c0_24, %c0_25] : memref<1x256x72xf32, #tpu.memory_space<vmem>>, vector<1x256x72xf32>
    %63 = vector.shape_cast %62 : vector<1x256x72xf32> to vector<256x72xf32>
    %cst_26 = arith.constant dense<0.000000e+00> : vector<128x72xf32>
    %64 = tpu.matmul %60, %63, %cst_26 {dimension_numbers = #tpu.dot_dimension_numbers<[1], [0], [0], [1], [0, 0, 1, 1], [], []>} : vector<128x256xf32>, vector<256x72xf32>, vector<128x72xf32> -> vector<128x72xf32>
    %65 = arith.addf %61, %64 : vector<128x72xf32>
    %c0_27 = arith.constant 0 : index
    %c0_28 = arith.constant 0 : index
    %66 = vector.load %arg8[%c0_27, %c0_28] : memref<128x72xf32, #tpu.memory_space<vmem>>, vector<128x72xf32>
    tpu.vector_store %arg8[%c0_27, %c0_28], %65 {strides = array<i32>} : memref<128x72xf32, #tpu.memory_space<vmem>>, vector<128x72xf32>,
    %c0_i32_29 = arith.constant 0 : i32
    %67 = arith.cmpi eq, %arg2, %c0_i32_29 : i32
    %68 = arith.extui %67 : i1 to i32
    %c0_i32_30 = arith.constant 0 : i32
    %69 = arith.cmpi ne, %68, %c0_i32_30 : i32
    scf.if %69 {
      %c0_31 = arith.constant 0 : index
      %c0_32 = arith.constant 0 : index
      %70 = vector.load %arg8[%c0_31, %c0_32] : memref<128x72xf32, #tpu.memory_space<vmem>>, vector<128x72xf32>
      %c0_33 = arith.constant 0 : index
      %c0_34 = arith.constant 0 : index
      %c0_35 = arith.constant 0 : index
      %71 = vector.load %arg6[%c0_33, %c0_34, %c0_35] : memref<1x128x72xf32, #tpu.memory_space<vmem>>, vector<1x128x72xf32>
      %72 = vector.shape_cast %71 : vector<1x128x72xf32> to vector<128x72xf32>
      %73 = vector.shape_cast %70 : vector<128x72xf32> to vector<1x128x72xf32>
      tpu.vector_store %arg6[%c0_33, %c0_34, %c0_35], %73 {strides = array<i32>} : memref<1x128x72xf32, #tpu.memory_space<vmem>>, vector<1x128x72xf32>,
      %cst_36 = arith.constant 9.99999974E-6 : f32
      %74 = vector.broadcast %cst_36 : f32 to vector<128x1xf32>
      %75 = arith.cmpf ogt, %7, %74 : vector<128x1xf32>
      %cst_37 = arith.constant 0.000000e+00 : f32
      %76 = vector.broadcast %cst_37 : f32 to vector<128x1xf32>
      %77 = arith.cmpf ogt, %12, %76 : vector<128x1xf32>
      %78 = arith.andi %75, %77 : vector<128x1xi1>
      %cst_38 = arith.constant 1.000000e+00 : f32
      %79 = vector.broadcast %cst_38 : f32 to vector<128x1xf32>
      %80 = arith.cmpf olt, %12, %79 : vector<128x1xf32>
      %81 = arith.andi %78, %80 : vector<128x1xi1>
      %cst_39 = arith.constant 0.000000e+00 : f32
      %82 = vector.broadcast %cst_39 : f32 to vector<128x1xf32>
      %83 = arith.cmpf ogt, %15, %82 : vector<128x1xf32>
      %84 = arith.andi %81, %83 : vector<128x1xi1>
      %cst_40 = arith.constant 1.000000e+00 : f32
      %85 = vector.broadcast %cst_40 : f32 to vector<128x1xf32>
      %86 = arith.cmpf olt, %15, %85 : vector<128x1xf32>
      %87 = arith.andi %84, %86 : vector<128x1xi1>
      %88 = arith.extui %87 : vector<128x1xi1> to vector<128x1xi32>
      %89 = arith.sitofp %88 : vector<128x1xi32> to vector<128x1xf32>
      %c0_41 = arith.constant 0 : index
      %c0_42 = arith.constant 0 : index
      %c0_43 = arith.constant 0 : index
      %90 = vector.load %arg7[%c0_41, %c0_42, %c0_43] : memref<1x128x1xf32, #tpu.memory_space<vmem>>, vector<1x128x1xf32>
      %91 = vector.shape_cast %90 : vector<1x128x1xf32> to vector<128x1xf32>
      %92 = vector.shape_cast %89 : vector<128x1xf32> to vector<1x128x1xf32>
      tpu.vector_store %arg7[%c0_41, %c0_42, %c0_43], %92 {strides = array<i32>} : memref<1x128x1xf32, #tpu.memory_space<vmem>>, vector<1x128x1xf32>,
    } else {
    }
    return
  }
  func.func @transform_0(%arg0: i32, %arg1: i32, %arg2: i32) -> (i32, i32, i32) {
    %c0_i32 = arith.constant 0 : i32
    %c0_i32_0 = arith.constant 0 : i32
    return %arg0, %arg1, %c0_i32 : i32, i32, i32
  }
  func.func @transform_1(%arg0: i32, %arg1: i32, %arg2: i32) -> (i32, i32) {
    %c0_i32 = arith.constant 0 : i32
    %c0_i32_0 = arith.constant 0 : i32
    %c0_i32_1 = arith.constant 0 : i32
    return %c0_i32, %c0_i32_0 : i32, i32
  }
  func.func @transform_2(%arg0: i32, %arg1: i32, %arg2: i32) -> (i32, i32, i32) {
    %c0_i32 = arith.constant 0 : i32
    %c0_i32_0 = arith.constant 0 : i32
    return %arg0, %arg2, %c0_i32 : i32, i32, i32
  }
  func.func @transform_3(%arg0: i32, %arg1: i32, %arg2: i32) -> (i32, i32, i32) {
    %c0_i32 = arith.constant 0 : i32
    %c0_i32_0 = arith.constant 0 : i32
    return %arg0, %arg1, %c0_i32 : i32, i32, i32
  }
  func.func @transform_4(%arg0: i32, %arg1: i32, %arg2: i32) -> (i32, i32, i32) {
    %c0_i32 = arith.constant 0 : i32
    %c0_i32_0 = arith.constant 0 : i32
    return %arg0, %arg1, %c0_i32 : i32, i32, i32
  }
}

</mosaic_0001>

<llo_original>
// kernel: tpu_custom_call.1
$region0: #{tpu_custom_call.1}
  #allocation0 [shape = 'u32[]', space=smem, size = 0x4, offset = 0x4, fixed_abs, tag = 'smem constant byte address 0x4 - core index']
  #allocation1 [shape = 'u32[144,128]{1,0:T(1,128)}', space=vmem, size = 0x12000, scoped, tag = 'internal scratch']
  #allocation2 [shape = 'f32[128,72]{1,0:T(8,128)}', space=vmem, size = 0x10000, scoped, tag = 'scratch operand']
  %s0 = inlined_call_operand.vmem [shape: f32[4,128,3], index: 0, kind: input, shape index: {}]
  %s1 = inlined_call_operand.vmem [shape: s32[128,256], index: 1, kind: input, shape index: {}]
  %s2 = inlined_call_operand.vmem [shape: f32[4,256,72], index: 2, kind: input, shape index: {}]
  %s3 = inlined_call_operand.vmem [shape: f32[4,128,72], index: 3, kind: output, shape index: {0}]
  %s4 = inlined_call_operand.vmem [shape: f32[4,128,1], index: 4, kind: output, shape index: {1}]
  %5 = xla_tuple %s3, %s4
  %s6 = sld [smem:[#allocation0]]
  $region61: #{tpu_custom_call.1} parent=0
    _
  %s8 = ssub.s32 1, %s6
  %s9 = scalar_select 0, %s8, %s6
  loop: start=0, step=1, limit=6
  $region2: #{tpu_custom_call.1} parent=0 // loop_pre_header
    _
  $region3: #{tpu_custom_call.1} parent=0 // loop_header
    %s11 = sphi 0, %s15
    %p12 = scmp.ge.s32.totalorder %s11, 6
    %s18 = sphi 0, %s37
    %s19 = sphi 0, %s33
    %s20 = sphi 0, %s29
    %s21 = sphi 0, %s18
    %s22 = sphi 0, %s19
    %s23 = sphi 0, %s20
    %s24 = sphi 0, %s21
    %s25 = sphi 0, %s22
    %s26 = sphi 0, %s23
    %s42 = sphi 0, %s44
    %s45 = sphi 0, %s42
    %s46 = sphi 0, %s45
    %s62 = sphi 0, %s46
    %s66 = sphi 0, %s66
    %s68 = sphi 0, %s66
    %s69 = sphi 0, %s68
    %s83 = sphi 0, %s69
    %s91 = sphi 0, %s93
    %s94 = sphi 0, %s91
    %s95 = sphi 0, %s94
    %s111 = sphi 0, %s95
    %s119 = sphi 0, %s121
    %s122 = sphi 0, %s119
    %s123 = sphi 0, %s122
    %s139 = sphi 0, %s123
    %s147 = sphi 0, %s149
    %s150 = sphi 0, %s147
    %s151 = sphi 0, %s150
    %s167 = sphi 0, %s151
  $region4: #{tpu_custom_call.1} parent=0 // loop_header_branch
    %14 = sbr.rel (%p12) target = $region8
  $region5: #{tpu_custom_call.1} parent=0 // loop_body
    %s16 = ssub.s32 %s11, 1
    %s17 = ssub.s32 %s11, 2
    %s27 = sadd.s32 1, %s20
    %p28 = scmp.ge.s32.totalorder %s27, 1
    %s29 = scalar_select %p28, 0, %s27
    %s30 = sadd.s32 1, %s19
    %s31 = scalar_select %p28, %s30, %s19
    %p32 = scmp.ge.s32.totalorder %s31, 1
    %s33 = scalar_select %p32, 0, %s31
    %s34 = sadd.s32 1, %s18
    %s35 = scalar_select %p32, %s34, %s18
    %p36 = scmp.ge.s32.totalorder %s35, 4
    %s37 = scalar_select %p36, 0, %s35
    %s38 = ssub.s32 %s18, %s37
    %s39 = ssub.s32 %s19, %s33
    %s40 = sor.u32 %s38, %s39
    %p41 = scmp.eq.s32.totalorder %s40, 0
    %s43 = sadd.s32 %s42, 1
    %s44 = scalar_select %p41, %s42, %s43
    %p47 = pneg %p41
    %p48 = scmp.eq.s32.totalorder %s11, 3
    %p49 = por %p47, %p48
    %p50 = scmp.ne.s32.totalorder %s42, %s45
    %p51 = scmp.eq.s32.totalorder %s11, 0
    %p52 = por %p50, %p51
    %p53 = scmp.ne.s32.totalorder %s42, %s45
    %p54 = scmp.eq.s32.totalorder %s16, 3
    %p55 = por %p53, %p54
    %p56 = scmp.ne.s32.totalorder %s45, %s46
    %p57 = scmp.eq.s32.totalorder %s16, 0
    %p58 = por %p56, %p57
    %p59 = scmp.ne.s32.totalorder %s45, %s46
    %p60 = scmp.eq.s32.totalorder %s17, 3
    %p61 = por %p59, %p60
    %p63 = scmp.ne.s32.totalorder %s46, %s62
    %p64 = scmp.eq.s32.totalorder %s17, 0
    %p65 = por %p63, %p64
    %s67 = sadd.s32 %s66, 1
    %p70 = scmp.eq.s32.totalorder %s11, 3
    %p71 = scmp.ne.s32.totalorder %s66, %s68
    %p72 = scmp.eq.s32.totalorder %s11, 0
    %p73 = por %p71, %p72
    %p74 = scmp.ne.s32.totalorder %s66, %s68
    %p75 = scmp.eq.s32.totalorder %s16, 3
    %p76 = por %p74, %p75
    %p77 = scmp.ne.s32.totalorder %s68, %s69
    %p78 = scmp.eq.s32.totalorder %s16, 0
    %p79 = por %p77, %p78
    %p80 = scmp.ne.s32.totalorder %s68, %s69
    %p81 = scmp.eq.s32.totalorder %s17, 3
    %p82 = por %p80, %p81
    %p84 = scmp.ne.s32.totalorder %s69, %s83
    %p85 = scmp.eq.s32.totalorder %s17, 0
    %p86 = por %p84, %p85
    %s87 = ssub.s32 %s18, %s37
    %s88 = ssub.s32 %s20, %s29
    %s89 = sor.u32 %s87, %s88
    %p90 = scmp.eq.s32.totalorder %s89, 0
    %s92 = sadd.s32 %s91, 1
    %s93 = scalar_select %p90, %s91, %s92
    %p96 = pneg %p90
    %p97 = scmp.eq.s32.totalorder %s11, 3
    %p98 = por %p96, %p97
    %p99 = scmp.ne.s32.totalorder %s91, %s94
    %p100 = scmp.eq.s32.totalorder %s11, 0
    %p101 = por %p99, %p100
    %p102 = scmp.ne.s32.totalorder %s91, %s94
    %p103 = scmp.eq.s32.totalorder %s16, 3
    %p104 = por %p102, %p103
    %p105 = scmp.ne.s32.totalorder %s94, %s95
    %p106 = scmp.eq.s32.totalorder %s16, 0
    %p107 = por %p105, %p106
    %p108 = scmp.ne.s32.totalorder %s94, %s95
    %p109 = scmp.eq.s32.totalorder %s17, 3
    %p110 = por %p108, %p109
    %p112 = scmp.ne.s32.totalorder %s95, %s111
    %p113 = scmp.eq.s32.totalorder %s17, 0
    %p114 = por %p112, %p113
    %s115 = ssub.s32 %s18, %s37
    %s116 = ssub.s32 %s19, %s33
    %s117 = sor.u32 %s115, %s116
    %p118 = scmp.eq.s32.totalorder %s117, 0
    %s120 = sadd.s32 %s119, 1
    %s121 = scalar_select %p118, %s119, %s120
    %p124 = pneg %p118
    %p125 = scmp.eq.s32.totalorder %s11, 3
    %p126 = por %p124, %p125
    %p127 = scmp.ne.s32.totalorder %s119, %s122
    %p128 = scmp.eq.s32.totalorder %s11, 0
    %p129 = por %p127, %p128
    %p130 = scmp.ne.s32.totalorder %s119, %s122
    %p131 = scmp.eq.s32.totalorder %s16, 3
    %p132 = por %p130, %p131
    %p133 = scmp.ne.s32.totalorder %s122, %s123
    %p134 = scmp.eq.s32.totalorder %s16, 0
    %p135 = por %p133, %p134
    %p136 = scmp.ne.s32.totalorder %s122, %s123
    %p137 = scmp.eq.s32.totalorder %s17, 3
    %p138 = por %p136, %p137
    %p140 = scmp.ne.s32.totalorder %s123, %s139
    %p141 = scmp.eq.s32.totalorder %s17, 0
    %p142 = por %p140, %p141
    %s143 = ssub.s32 %s18, %s37
    %s144 = ssub.s32 %s19, %s33
    %s145 = sor.u32 %s143, %s144
    %p146 = scmp.eq.s32.totalorder %s145, 0
    %s148 = sadd.s32 %s147, 1
    %s149 = scalar_select %p146, %s147, %s148
    %p152 = pneg %p146
    %p153 = scmp.eq.s32.totalorder %s11, 3
    %p154 = por %p152, %p153
    %p155 = scmp.ne.s32.totalorder %s147, %s150
    %p156 = scmp.eq.s32.totalorder %s11, 0
    %p157 = por %p155, %p156
    %p158 = scmp.ne.s32.totalorder %s147, %s150
    %p159 = scmp.eq.s32.totalorder %s16, 3
    %p160 = por %p158, %p159
    %p161 = scmp.ne.s32.totalorder %s150, %s151
    %p162 = scmp.eq.s32.totalorder %s16, 0
    %p163 = por %p161, %p162
    %p164 = scmp.ne.s32.totalorder %s150, %s151
    %p165 = scmp.eq.s32.totalorder %s17, 3
    %p166 = por %p164, %p165
    %p168 = scmp.ne.s32.totalorder %s151, %s167
    %p169 = scmp.eq.s32.totalorder %s17, 0
    %p170 = por %p168, %p169
    %p171 = scmp.le.s32.totalorder 1, %s11
    %p172 = scmp.lt.s32.totalorder %s11, 5
    %p173 = pnand %p171, %p172
    %p174 = pneg %p173
    // Predicated region
    $region9: #{tpu_custom_call.1} parent=5 // pred_check
      _
    $region10: #{tpu_custom_call.1} parent=5 // pred_check_branch
      %176 = sbr.rel (%p173) target = $region12
    $region11: #{tpu_custom_call.1} parent=5 // pred_region
      %s177 = ssub.s32 %s11, 1
      // Predicated region
      $region13: #{tpu_custom_call.1} parent=11 // pred_check
        %p178 = pneg %p79
      $region14: #{tpu_custom_call.1} parent=11 // pred_check_branch
        %180 = sbr.rel (%p178) target = $region16
      $region15: #{tpu_custom_call.1} parent=11 // pred_region
        _
      $region16: #{tpu_custom_call.1} parent=11 // pred_fallthru
        _
    $region12: #{tpu_custom_call.1} parent=5 // pred_fallthru
      _
    %p181 = scmp.lt.s32.totalorder %s11, 4
    // Predicated region
    $region17: #{tpu_custom_call.1} parent=5 // pred_check
      %p182 = pneg %p181
    $region18: #{tpu_custom_call.1} parent=5 // pred_check_branch
      %184 = sbr.rel (%p182) target = $region20
    $region19: #{tpu_custom_call.1} parent=5 // pred_region
      // Predicated region
      $region21: #{tpu_custom_call.1} parent=19 // pred_check
        %p185 = pneg %p52
      $region22: #{tpu_custom_call.1} parent=19 // pred_check_branch
        %187 = sbr.rel (%p185) target = $region24
      $region23: #{tpu_custom_call.1} parent=19 // pred_region
        %s188 = smul.u32 16, %s19
        %p189 = scmp.lt.s32.totalorder %s18, 3
        %s190 = scalar_select %p189, %s18, 3
        %p191 = scmp.lt.s32.totalorder %s188, 15
        %s192 = scalar_select %p191, %s188, 15
        %s193 = smul.addr %s190, 16
        %s194 = sadd.s32 %s192, %s193
        %s195 = smul.addr %s194, 8
        %s196 = scalar_lea.vmem %s0, %s195
        %s197 = smul.u32 16, %s19
      $region24: #{tpu_custom_call.1} parent=19 // pred_fallthru
        _
      // Predicated region
      $region25: #{tpu_custom_call.1} parent=19 // pred_check
        %p198 = pneg %p101
      $region26: #{tpu_custom_call.1} parent=19 // pred_check_branch
        %200 = sbr.rel (%p198) target = $region28
      $region27: #{tpu_custom_call.1} parent=19 // pred_region
        %s201 = smul.u32 32, %s20
        %p202 = scmp.lt.s32.totalorder %s18, 3
        %s203 = scalar_select %p202, %s18, 3
        %p204 = scmp.lt.s32.totalorder %s201, 31
        %s205 = scalar_select %p204, %s201, 31
        %s206 = smul.addr %s203, 32
        %s207 = sadd.s32 %s205, %s206
        %s208 = smul.addr %s207, 8
        %s209 = scalar_lea.vmem %s2, %s208
        %s210 = smul.u32 32, %s20
      $region28: #{tpu_custom_call.1} parent=19 // pred_fallthru
        _
    $region20: #{tpu_custom_call.1} parent=5 // pred_fallthru
      _
    %p211 = scmp.le.s32.totalorder 1, %s11
    %p212 = scmp.lt.s32.totalorder %s11, 5
    %p213 = pnand %p211, %p212
    %p214 = pneg %p213
    // Predicated region
    $region29: #{tpu_custom_call.1} parent=5 // pred_check
      _
    $region30: #{tpu_custom_call.1} parent=5 // pred_check_branch
      %216 = sbr.rel (%p213) target = $region32
    $region31: #{tpu_custom_call.1} parent=5 // pred_region
      %s217 = ssub.s32 %s11, 1
      %s218 = smul.u32 16, %s22
      %p219 = scmp.lt.s32.totalorder %s21, 3
      %s220 = scalar_select %p219, %s21, 3
      %p221 = scmp.lt.s32.totalorder %s218, 15
      %s222 = scalar_select %p221, %s218, 15
      %s223 = smul.addr %s220, 16
      %s224 = sadd.s32 %s222, %s223
      %s225 = smul.addr %s224, 8
      %s226 = scalar_lea.vmem %s0, %s225
      %p227 = pneg %p58
      %p228 = pneg %p55
      %p229 = pneg %p79
      %p230 = pneg %p76
      %s231 = smul.u32 32, %s23
      %p232 = scmp.lt.s32.totalorder %s21, 3
      %s233 = scalar_select %p232, %s21, 3
      %p234 = scmp.lt.s32.totalorder %s231, 31
      %s235 = scalar_select %p234, %s231, 31
      %s236 = smul.addr %s233, 32
      %s237 = sadd.s32 %s235, %s236
      %s238 = smul.addr %s237, 8
      %s239 = scalar_lea.vmem %s2, %s238
      %p240 = pneg %p107
      %p241 = pneg %p104
      %p242 = pneg %p135
      %p243 = pneg %p132
      %s244 = smul.u32 16, %s22
      %p245 = scmp.lt.s32.totalorder %s21, 3
      %s246 = scalar_select %p245, %s21, 3
      %p247 = scmp.lt.s32.totalorder %s244, 15
      %s248 = scalar_select %p247, %s244, 15
      %s249 = smul.addr %s246, 16
      %s250 = sadd.s32 %s248, %s249
      %s251 = smul.addr %s250, 8
      %s252 = scalar_lea.vmem %s3, %s251
      %p253 = pneg %p163
      %p254 = pneg %p160
      %s255 = smul.u32 16, %s22
      %p256 = scmp.lt.s32.totalorder %s21, 3
      %s257 = scalar_select %p256, %s21, 3
      %p258 = scmp.lt.s32.totalorder %s255, 15
      %s259 = scalar_select %p258, %s255, 15
      %s260 = smul.addr %s257, 16
      %s261 = sadd.s32 %s259, %s260
      %s262 = smul.addr %s261, 8
      %s263 = scalar_lea.vmem %s4, %s262
      %s264 = smul.u32 16, %s22
      %p265 = scmp.lt.s32.totalorder %s21, 3
      %s266 = scalar_select %p265, %s21, 3
      %p267 = scmp.lt.s32.totalorder %s264, 15
      %s268 = scalar_select %p267, %s264, 15
      %s269 = smul.addr %s266, 16
      %s270 = sadd.s32 %s268, %s269
      %s271 = smul.addr %s270, 8
      %s272 = scalar_lea.vmem %s0, %s271
      %s273 = smul.u32 16, %s22
      %s274 = smul.u32 32, %s23
      %p275 = scmp.lt.s32.totalorder %s21, 3
      %s276 = scalar_select %p275, %s21, 3
      %p277 = scmp.lt.s32.totalorder %s274, 31
      %s278 = scalar_select %p277, %s274, 31
      %s279 = smul.addr %s276, 32
      %s280 = sadd.s32 %s278, %s279
      %s281 = smul.addr %s280, 8
      %s282 = scalar_lea.vmem %s2, %s281
      %s283 = smul.u32 32, %s23
      %s284 = smul.u32 16, %s22
      %p285 = scmp.lt.s32.totalorder %s21, 3
      %s286 = scalar_select %p285, %s21, 3
      %p287 = scmp.lt.s32.totalorder %s284, 15
      %s288 = scalar_select %p287, %s284, 15
      %s289 = smul.addr %s286, 16
      %s290 = sadd.s32 %s288, %s289
      %s291 = smul.addr %s290, 8
      %s292 = scalar_lea.vmem %s3, %s291
      %s293 = smul.u32 16, %s22
      %s294 = smul.u32 16, %s22
      %p295 = scmp.lt.s32.totalorder %s21, 3
      %s296 = scalar_select %p295, %s21, 3
      %p297 = scmp.lt.s32.totalorder %s294, 15
      %s298 = scalar_select %p297, %s294, 15
      %s299 = smul.addr %s296, 16
      %s300 = sadd.s32 %s298, %s299
      %s301 = smul.addr %s300, 8
      %s302 = scalar_lea.vmem %s4, %s301
      %s303 = smul.u32 16, %s22
      %p304 = scmp.eq.s32.totalorder %s23, 0
      // Predicated region
      $region33: #{tpu_custom_call.1} parent=31 // pred_check
        %p305 = pneg %p304
      $region34: #{tpu_custom_call.1} parent=31 // pred_check_branch
        %307 = sbr.rel (%p305) target = $region36
      $region35: #{tpu_custom_call.1} parent=31 // pred_region
        %vm308 = vcmask 588800
        %309 = vst.msk [vmem:[#allocation2] sm:$0xff] %vm308, 0.0
        %310 = vst.msk [vmem:[#allocation2 + $0x8] sm:$0xff] %vm308, 0.0
        %311 = vst.msk [vmem:[#allocation2 + $0x10] sm:$0xff] %vm308, 0.0
        %312 = vst.msk [vmem:[#allocation2 + $0x18] sm:$0xff] %vm308, 0.0
        %313 = vst.msk [vmem:[#allocation2 + $0x20] sm:$0xff] %vm308, 0.0
        %314 = vst.msk [vmem:[#allocation2 + $0x28] sm:$0xff] %vm308, 0.0
        %315 = vst.msk [vmem:[#allocation2 + $0x30] sm:$0xff] %vm308, 0.0
        %316 = vst.msk [vmem:[#allocation2 + $0x38] sm:$0xff] %vm308, 0.0
        %317 = vst.msk [vmem:[#allocation2 + $0x40] sm:$0xff] %vm308, 0.0
        %318 = vst.msk [vmem:[#allocation2 + $0x48] sm:$0xff] %vm308, 0.0
        %319 = vst.msk [vmem:[#allocation2 + $0x50] sm:$0xff] %vm308, 0.0
        %320 = vst.msk [vmem:[#allocation2 + $0x58] sm:$0xff] %vm308, 0.0
        %321 = vst.msk [vmem:[#allocation2 + $0x60] sm:$0xff] %vm308, 0.0
        %322 = vst.msk [vmem:[#allocation2 + $0x68] sm:$0xff] %vm308, 0.0
        %323 = vst.msk [vmem:[#allocation2 + $0x70] sm:$0xff] %vm308, 0.0
        %324 = vst.msk [vmem:[#allocation2 + $0x78] sm:$0xff] %vm308, 0.0
      $region36: #{tpu_custom_call.1} parent=31 // pred_fallthru
        _
      %v325 = vld [vmem:[%s272] sm:$0xff]
      %v326 = vld [vmem:[%s272 + $0x8] sm:$0xff]
      %v327 = vld [vmem:[%s272 + $0x10] sm:$0xff]
      %v328 = vld [vmem:[%s272 + $0x18] sm:$0xff]
      %v329 = vld [vmem:[%s272 + $0x20] sm:$0xff]
      %v330 = vld [vmem:[%s272 + $0x28] sm:$0xff]
      %v331 = vld [vmem:[%s272 + $0x30] sm:$0xff]
      %v332 = vld [vmem:[%s272 + $0x38] sm:$0xff]
      %v333 = vld [vmem:[%s272 + $0x40] sm:$0xff]
      %v334 = vld [vmem:[%s272 + $0x48] sm:$0xff]
      %v335 = vld [vmem:[%s272 + $0x50] sm:$0xff]
      %v336 = vld [vmem:[%s272 + $0x58] sm:$0xff]
      %v337 = vld [vmem:[%s272 + $0x60] sm:$0xff]
      %v338 = vld [vmem:[%s272 + $0x68] sm:$0xff]
      %v339 = vld [vmem:[%s272 + $0x70] sm:$0xff]
      %v340 = vld [vmem:[%s272 + $0x78] sm:$0xff]
      %v341 = vmax.f32 %v325, 1e-05
      %v342 = vmax.f32 %v326, 1e-05
      %v343 = vmax.f32 %v327, 1e-05
      %v344 = vmax.f32 %v328, 1e-05
      %v345 = vmax.f32 %v329, 1e-05
      %v346 = vmax.f32 %v330, 1e-05
      %v347 = vmax.f32 %v331, 1e-05
      %v348 = vmax.f32 %v332, 1e-05
      %v349 = vmax.f32 %v333, 1e-05
      %v350 = vmax.f32 %v334, 1e-05
      %v351 = vmax.f32 %v335, 1e-05
      %v352 = vmax.f32 %v336, 1e-05
      %v353 = vmax.f32 %v337, 1e-05
      %v354 = vmax.f32 %v338, 1e-05
      %v355 = vmax.f32 %v339, 1e-05
      %v356 = vmax.f32 %v340, 1e-05
      %373 = vrot.lane.b32.xlu0 %v341, 126
      %v374 = vpop.permute.xlu0 %373
      %375 = vrot.lane.b32.xlu0 %v342, 126
      %v376 = vpop.permute.xlu0 %375
      %377 = vrot.lane.b32.xlu0 %v343, 126
      %v378 = vpop.permute.xlu0 %377
      %379 = vrot.lane.b32.xlu0 %v344, 126
      %v380 = vpop.permute.xlu0 %379
      %381 = vrot.lane.b32.xlu0 %v345, 126
      %v382 = vpop.permute.xlu0 %381
      %383 = vrot.lane.b32.xlu0 %v346, 126
      %v384 = vpop.permute.xlu0 %383
      %385 = vrot.lane.b32.xlu0 %v347, 126
      %v386 = vpop.permute.xlu0 %385
      %387 = vrot.lane.b32.xlu0 %v348, 126
      %v388 = vpop.permute.xlu0 %387
      %389 = vrot.lane.b32.xlu0 %v349, 126
      %v390 = vpop.permute.xlu0 %389
      %391 = vrot.lane.b32.xlu0 %v350, 126
      %v392 = vpop.permute.xlu0 %391
      %393 = vrot.lane.b32.xlu0 %v351, 126
      %v394 = vpop.permute.xlu0 %393
      %395 = vrot.lane.b32.xlu0 %v352, 126
      %v396 = vpop.permute.xlu0 %395
      %397 = vrot.lane.b32.xlu0 %v353, 126
      %v398 = vpop.permute.xlu0 %397
      %399 = vrot.lane.b32.xlu0 %v354, 126
      %v400 = vpop.permute.xlu0 %399
      %401 = vrot.lane.b32.xlu0 %v355, 126
      %v402 = vpop.permute.xlu0 %401
      %403 = vrot.lane.b32.xlu0 %v356, 126
      %v404 = vpop.permute.xlu0 %403
      %v421 = vrcp.pop %v374
      %v422 = vmul.f32 %v325, %v421
      %v423 = vrcp.pop %v376
      %v424 = vmul.f32 %v326, %v423
      %v425 = vrcp.pop %v378
      %v426 = vmul.f32 %v327, %v425
      %v427 = vrcp.pop %v380
      %v428 = vmul.f32 %v328, %v427
      %v429 = vrcp.pop %v382
      %v430 = vmul.f32 %v329, %v429
      %v431 = vrcp.pop %v384
      %v432 = vmul.f32 %v330, %v431
      %v433 = vrcp.pop %v386
      %v434 = vmul.f32 %v331, %v433
      %v435 = vrcp.pop %v388
      %v436 = vmul.f32 %v332, %v435
      %v437 = vrcp.pop %v390
      %v438 = vmul.f32 %v333, %v437
      %v439 = vrcp.pop %v392
      %v440 = vmul.f32 %v334, %v439
      %v441 = vrcp.pop %v394
      %v442 = vmul.f32 %v335, %v441
      %v443 = vrcp.pop %v396
      %v444 = vmul.f32 %v336, %v443
      %v445 = vrcp.pop %v398
      %v446 = vmul.f32 %v337, %v445
      %v447 = vrcp.pop %v400
      %v448 = vmul.f32 %v338, %v447
      %v449 = vrcp.pop %v402
      %v450 = vmul.f32 %v339, %v449
      %v451 = vrcp.pop %v404
      %v452 = vmul.f32 %v340, %v451
      %v453 = vrcp.pop 32.0
      %v454 = vmul.f32 %v422, %v453
      %v455 = vmul.f32 %v424, %v453
      %v456 = vmul.f32 %v426, %v453
      %v457 = vmul.f32 %v428, %v453
      %v458 = vmul.f32 %v430, %v453
      %v459 = vmul.f32 %v432, %v453
      %v460 = vmul.f32 %v434, %v453
      %v461 = vmul.f32 %v436, %v453
      %v462 = vmul.f32 %v438, %v453
      %v463 = vmul.f32 %v440, %v453
      %v464 = vmul.f32 %v442, %v453
      %v465 = vmul.f32 %v444, %v453
      %v466 = vmul.f32 %v446, %v453
      %v467 = vmul.f32 %v448, %v453
      %v468 = vmul.f32 %v450, %v453
      %v469 = vmul.f32 %v452, %v453
      %470 = vrot.lane.b32.xlu0 %v341, 127
      %v471 = vpop.permute.xlu0 %470
      %472 = vrot.lane.b32.xlu0 %v342, 127
      %v473 = vpop.permute.xlu0 %472
      %474 = vrot.lane.b32.xlu0 %v343, 127
      %v475 = vpop.permute.xlu0 %474
      %476 = vrot.lane.b32.xlu0 %v344, 127
      %v477 = vpop.permute.xlu0 %476
      %478 = vrot.lane.b32.xlu0 %v345, 127
      %v479 = vpop.permute.xlu0 %478
      %480 = vrot.lane.b32.xlu0 %v346, 127
      %v481 = vpop.permute.xlu0 %480
      %482 = vrot.lane.b32.xlu0 %v347, 127
      %v483 = vpop.permute.xlu0 %482
      %484 = vrot.lane.b32.xlu0 %v348, 127
      %v485 = vpop.permute.xlu0 %484
      %486 = vrot.lane.b32.xlu0 %v349, 127
      %v487 = vpop.permute.xlu0 %486
      %488 = vrot.lane.b32.xlu0 %v350, 127
      %v489 = vpop.permute.xlu0 %488
      %490 = vrot.lane.b32.xlu0 %v351, 127
      %v491 = vpop.permute.xlu0 %490
      %492 = vrot.lane.b32.xlu0 %v352, 127
      %v493 = vpop.permute.xlu0 %492
      %494 = vrot.lane.b32.xlu0 %v353, 127
      %v495 = vpop.permute.xlu0 %494
      %496 = vrot.lane.b32.xlu0 %v354, 127
      %v497 = vpop.permute.xlu0 %496
      %498 = vrot.lane.b32.xlu0 %v355, 127
      %v499 = vpop.permute.xlu0 %498
      %500 = vrot.lane.b32.xlu0 %v356, 127
      %v501 = vpop.permute.xlu0 %500
      %v518 = vrcp.pop %v471
      %v519 = vmul.f32 %v325, %v518
      %v520 = vrcp.pop %v473
      %v521 = vmul.f32 %v326, %v520
      %v522 = vrcp.pop %v475
      %v523 = vmul.f32 %v327, %v522
      %v524 = vrcp.pop %v477
      %v525 = vmul.f32 %v328, %v524
      %v526 = vrcp.pop %v479
      %v527 = vmul.f32 %v329, %v526
      %v528 = vrcp.pop %v481
      %v529 = vmul.f32 %v330, %v528
      %v530 = vrcp.pop %v483
      %v531 = vmul.f32 %v331, %v530
      %v532 = vrcp.pop %v485
      %v533 = vmul.f32 %v332, %v532
      %v534 = vrcp.pop %v487
      %v535 = vmul.f32 %v333, %v534
      %v536 = vrcp.pop %v489
      %v537 = vmul.f32 %v334, %v536
      %v538 = vrcp.pop %v491
      %v539 = vmul.f32 %v335, %v538
      %v540 = vrcp.pop %v493
      %v541 = vmul.f32 %v336, %v540
      %v542 = vrcp.pop %v495
      %v543 = vmul.f32 %v337, %v542
      %v544 = vrcp.pop %v497
      %v545 = vmul.f32 %v338, %v544
      %v546 = vrcp.pop %v499
      %v547 = vmul.f32 %v339, %v546
      %v548 = vrcp.pop %v501
      %v549 = vmul.f32 %v340, %v548
      %v550 = vmul.f32 %v519, %v453
      %v551 = vmul.f32 %v521, %v453
      %v552 = vmul.f32 %v523, %v453
      %v553 = vmul.f32 %v525, %v453
      %v554 = vmul.f32 %v527, %v453
      %v555 = vmul.f32 %v529, %v453
      %v556 = vmul.f32 %v531, %v453
      %v557 = vmul.f32 %v533, %v453
      %v558 = vmul.f32 %v535, %v453
      %v559 = vmul.f32 %v537, %v453
      %v560 = vmul.f32 %v539, %v453
      %v561 = vmul.f32 %v541, %v453
      %v562 = vmul.f32 %v543, %v453
      %v563 = vmul.f32 %v545, %v453
      %v564 = vmul.f32 %v547, %v453
      %v565 = vmul.f32 %v549, %v453
      %v566 = vmul.f32 %v454, 16.0
      %v567 = vmul.f32 %v455, 16.0
      %v568 = vmul.f32 %v456, 16.0
      %v569 = vmul.f32 %v457, 16.0
      %v570 = vmul.f32 %v458, 16.0
      %v571 = vmul.f32 %v459, 16.0
      %v572 = vmul.f32 %v460, 16.0
      %v573 = vmul.f32 %v461, 16.0
      %v574 = vmul.f32 %v462, 16.0
      %v575 = vmul.f32 %v463, 16.0
      %v576 = vmul.f32 %v464, 16.0
      %v577 = vmul.f32 %v465, 16.0
      %v578 = vmul.f32 %v466, 16.0
      %v579 = vmul.f32 %v467, 16.0
      %v580 = vmul.f32 %v468, 16.0
      %v581 = vmul.f32 %v469, 16.0
      %v582 = vsub.f32 %v566, 0.5
      %v583 = vsub.f32 %v567, 0.5
      %v584 = vsub.f32 %v568, 0.5
      %v585 = vsub.f32 %v569, 0.5
      %v586 = vsub.f32 %v570, 0.5
      %v587 = vsub.f32 %v571, 0.5
      %v588 = vsub.f32 %v572, 0.5
      %v589 = vsub.f32 %v573, 0.5
      %v590 = vsub.f32 %v574, 0.5
      %v591 = vsub.f32 %v575, 0.5
      %v592 = vsub.f32 %v576, 0.5
      %v593 = vsub.f32 %v577, 0.5
      %v594 = vsub.f32 %v578, 0.5
      %v595 = vsub.f32 %v579, 0.5
      %v596 = vsub.f32 %v580, 0.5
      %v597 = vsub.f32 %v581, 0.5
      %v598 = vround.ne.pseudo %v582
      %v599 = vround.ne.pseudo %v583
      %v600 = vround.ne.pseudo %v584
      %v601 = vround.ne.pseudo %v585
      %v602 = vround.ne.pseudo %v586
      %v603 = vround.ne.pseudo %v587
      %v604 = vround.ne.pseudo %v588
      %v605 = vround.ne.pseudo %v589
      %v606 = vround.ne.pseudo %v590
      %v607 = vround.ne.pseudo %v591
      %v608 = vround.ne.pseudo %v592
      %v609 = vround.ne.pseudo %v593
      %v610 = vround.ne.pseudo %v594
      %v611 = vround.ne.pseudo %v595
      %v612 = vround.ne.pseudo %v596
      %v613 = vround.ne.pseudo %v597
      %v614 = vmul.f32 %v550, 16.0
      %v615 = vmul.f32 %v551, 16.0
      %v616 = vmul.f32 %v552, 16.0
      %v617 = vmul.f32 %v553, 16.0
      %v618 = vmul.f32 %v554, 16.0
      %v619 = vmul.f32 %v555, 16.0
      %v620 = vmul.f32 %v556, 16.0
      %v621 = vmul.f32 %v557, 16.0
      %v622 = vmul.f32 %v558, 16.0
      %v623 = vmul.f32 %v559, 16.0
      %v624 = vmul.f32 %v560, 16.0
      %v625 = vmul.f32 %v561, 16.0
      %v626 = vmul.f32 %v562, 16.0
      %v627 = vmul.f32 %v563, 16.0
      %v628 = vmul.f32 %v564, 16.0
      %v629 = vmul.f32 %v565, 16.0
      %v630 = vsub.f32 %v614, 0.5
      %v631 = vsub.f32 %v615, 0.5
      %v632 = vsub.f32 %v616, 0.5
      %v633 = vsub.f32 %v617, 0.5
      %v634 = vsub.f32 %v618, 0.5
      %v635 = vsub.f32 %v619, 0.5
      %v636 = vsub.f32 %v620, 0.5
      %v637 = vsub.f32 %v621, 0.5
      %v638 = vsub.f32 %v622, 0.5
      %v639 = vsub.f32 %v623, 0.5
      %v640 = vsub.f32 %v624, 0.5
      %v641 = vsub.f32 %v625, 0.5
      %v642 = vsub.f32 %v626, 0.5
      %v643 = vsub.f32 %v627, 0.5
      %v644 = vsub.f32 %v628, 0.5
      %v645 = vsub.f32 %v629, 0.5
      %v646 = vround.ne.pseudo %v630
      %v647 = vround.ne.pseudo %v631
      %v648 = vround.ne.pseudo %v632
      %v649 = vround.ne.pseudo %v633
      %v650 = vround.ne.pseudo %v634
      %v651 = vround.ne.pseudo %v635
      %v652 = vround.ne.pseudo %v636
      %v653 = vround.ne.pseudo %v637
      %v654 = vround.ne.pseudo %v638
      %v655 = vround.ne.pseudo %v639
      %v656 = vround.ne.pseudo %v640
      %v657 = vround.ne.pseudo %v641
      %v658 = vround.ne.pseudo %v642
      %v659 = vround.ne.pseudo %v643
      %v660 = vround.ne.pseudo %v644
      %v661 = vround.ne.pseudo %v645
      %vm662 = vcmp.ge.f32.partialorder %v598, 0.0
      %vm663 = vcmp.ge.f32.partialorder %v599, 0.0
      %vm664 = vcmp.ge.f32.partialorder %v600, 0.0
      %vm665 = vcmp.ge.f32.partialorder %v601, 0.0
      %vm666 = vcmp.ge.f32.partialorder %v602, 0.0
      %vm667 = vcmp.ge.f32.partialorder %v603, 0.0
      %vm668 = vcmp.ge.f32.partialorder %v604, 0.0
      %vm669 = vcmp.ge.f32.partialorder %v605, 0.0
      %vm670 = vcmp.ge.f32.partialorder %v606, 0.0
      %vm671 = vcmp.ge.f32.partialorder %v607, 0.0
      %vm672 = vcmp.ge.f32.partialorder %v608, 0.0
      %vm673 = vcmp.ge.f32.partialorder %v609, 0.0
      %vm674 = vcmp.ge.f32.partialorder %v610, 0.0
      %vm675 = vcmp.ge.f32.partialorder %v611, 0.0
      %vm676 = vcmp.ge.f32.partialorder %v612, 0.0
      %vm677 = vcmp.ge.f32.partialorder %v613, 0.0
      %vm678 = vcmp.le.f32.partialorder %v598, 15.0
      %vm679 = vcmp.le.f32.partialorder %v599, 15.0
      %vm680 = vcmp.le.f32.partialorder %v600, 15.0
      %vm681 = vcmp.le.f32.partialorder %v601, 15.0
      %vm682 = vcmp.le.f32.partialorder %v602, 15.0
      %vm683 = vcmp.le.f32.partialorder %v603, 15.0
      %vm684 = vcmp.le.f32.partialorder %v604, 15.0
      %vm685 = vcmp.le.f32.partialorder %v605, 15.0
      %vm686 = vcmp.le.f32.partialorder %v606, 15.0
      %vm687 = vcmp.le.f32.partialorder %v607, 15.0
      %vm688 = vcmp.le.f32.partialorder %v608, 15.0
      %vm689 = vcmp.le.f32.partialorder %v609, 15.0
      %vm690 = vcmp.le.f32.partialorder %v610, 15.0
      %vm691 = vcmp.le.f32.partialorder %v611, 15.0
      %vm692 = vcmp.le.f32.partialorder %v612, 15.0
      %vm693 = vcmp.le.f32.partialorder %v613, 15.0
      %vm694 = vmand %vm662, %vm678
      %vm695 = vmand %vm663, %vm679
      %vm696 = vmand %vm664, %vm680
      %vm697 = vmand %vm665, %vm681
      %vm698 = vmand %vm666, %vm682
      %vm699 = vmand %vm667, %vm683
      %vm700 = vmand %vm668, %vm684
      %vm701 = vmand %vm669, %vm685
      %vm702 = vmand %vm670, %vm686
      %vm703 = vmand %vm671, %vm687
      %vm704 = vmand %vm672, %vm688
      %vm705 = vmand %vm673, %vm689
      %vm706 = vmand %vm674, %vm690
      %vm707 = vmand %vm675, %vm691
      %vm708 = vmand %vm676, %vm692
      %vm709 = vmand %vm677, %vm693
      %vm710 = vcmp.ge.f32.partialorder %v646, 0.0
      %vm711 = vcmp.ge.f32.partialorder %v647, 0.0
      %vm712 = vcmp.ge.f32.partialorder %v648, 0.0
      %vm713 = vcmp.ge.f32.partialorder %v649, 0.0
      %vm714 = vcmp.ge.f32.partialorder %v650, 0.0
      %vm715 = vcmp.ge.f32.partialorder %v651, 0.0
      %vm716 = vcmp.ge.f32.partialorder %v652, 0.0
      %vm717 = vcmp.ge.f32.partialorder %v653, 0.0
      %vm718 = vcmp.ge.f32.partialorder %v654, 0.0
      %vm719 = vcmp.ge.f32.partialorder %v655, 0.0
      %vm720 = vcmp.ge.f32.partialorder %v656, 0.0
      %vm721 = vcmp.ge.f32.partialorder %v657, 0.0
      %vm722 = vcmp.ge.f32.partialorder %v658, 0.0
      %vm723 = vcmp.ge.f32.partialorder %v659, 0.0
      %vm724 = vcmp.ge.f32.partialorder %v660, 0.0
      %vm725 = vcmp.ge.f32.partialorder %v661, 0.0
      %v726 = vsel %vm710, 1, 0
      %v727 = vsel %vm711, 1, 0
      %v728 = vsel %vm712, 1, 0
      %v729 = vsel %vm713, 1, 0
      %v730 = vsel %vm714, 1, 0
      %v731 = vsel %vm715, 1, 0
      %v732 = vsel %vm716, 1, 0
      %v733 = vsel %vm717, 1, 0
      %v734 = vsel %vm718, 1, 0
      %v735 = vsel %vm719, 1, 0
      %v736 = vsel %vm720, 1, 0
      %v737 = vsel %vm721, 1, 0
      %v738 = vsel %vm722, 1, 0
      %v739 = vsel %vm723, 1, 0
      %v740 = vsel %vm724, 1, 0
      %v741 = vsel %vm725, 1, 0
      %742 = vrot.lane.b32.xlu0 %v726, 127
      %v743 = vpop.permute.xlu0 %742
      %744 = vrot.lane.b32.xlu0 %v727, 127
      %v745 = vpop.permute.xlu0 %744
      %746 = vrot.lane.b32.xlu0 %v728, 127
      %v747 = vpop.permute.xlu0 %746
      %748 = vrot.lane.b32.xlu0 %v729, 127
      %v749 = vpop.permute.xlu0 %748
      %750 = vrot.lane.b32.xlu0 %v730, 127
      %v751 = vpop.permute.xlu0 %750
      %752 = vrot.lane.b32.xlu0 %v731, 127
      %v753 = vpop.permute.xlu0 %752
      %754 = vrot.lane.b32.xlu0 %v732, 127
      %v755 = vpop.permute.xlu0 %754
      %756 = vrot.lane.b32.xlu0 %v733, 127
      %v757 = vpop.permute.xlu0 %756
      %758 = vrot.lane.b32.xlu0 %v734, 127
      %v759 = vpop.permute.xlu0 %758
      %760 = vrot.lane.b32.xlu0 %v735, 127
      %v761 = vpop.permute.xlu0 %760
      %762 = vrot.lane.b32.xlu0 %v736, 127
      %v763 = vpop.permute.xlu0 %762
      %764 = vrot.lane.b32.xlu0 %v737, 127
      %v765 = vpop.permute.xlu0 %764
      %766 = vrot.lane.b32.xlu0 %v738, 127
      %v767 = vpop.permute.xlu0 %766
      %768 = vrot.lane.b32.xlu0 %v739, 127
      %v769 = vpop.permute.xlu0 %768
      %770 = vrot.lane.b32.xlu0 %v740, 127
      %v771 = vpop.permute.xlu0 %770
      %772 = vrot.lane.b32.xlu0 %v741, 127
      %v773 = vpop.permute.xlu0 %772
      %vm774 = vcmp.ne.s32.totalorder %v743, 0
      %vm775 = vcmp.ne.s32.totalorder %v745, 0
      %vm776 = vcmp.ne.s32.totalorder %v747, 0
      %vm777 = vcmp.ne.s32.totalorder %v749, 0
      %vm778 = vcmp.ne.s32.totalorder %v751, 0
      %vm779 = vcmp.ne.s32.totalorder %v753, 0
      %vm780 = vcmp.ne.s32.totalorder %v755, 0
      %vm781 = vcmp.ne.s32.totalorder %v757, 0
      %vm782 = vcmp.ne.s32.totalorder %v759, 0
      %vm783 = vcmp.ne.s32.totalorder %v761, 0
      %vm784 = vcmp.ne.s32.totalorder %v763, 0
      %vm785 = vcmp.ne.s32.totalorder %v765, 0
      %vm786 = vcmp.ne.s32.totalorder %v767, 0
      %vm787 = vcmp.ne.s32.totalorder %v769, 0
      %vm788 = vcmp.ne.s32.totalorder %v771, 0
      %vm789 = vcmp.ne.s32.totalorder %v773, 0
      %vm790 = vmand %vm694, %vm774
      %vm791 = vmand %vm695, %vm775
      %vm792 = vmand %vm696, %vm776
      %vm793 = vmand %vm697, %vm777
      %vm794 = vmand %vm698, %vm778
      %vm795 = vmand %vm699, %vm779
      %vm796 = vmand %vm700, %vm780
      %vm797 = vmand %vm701, %vm781
      %vm798 = vmand %vm702, %vm782
      %vm799 = vmand %vm703, %vm783
      %vm800 = vmand %vm704, %vm784
      %vm801 = vmand %vm705, %vm785
      %vm802 = vmand %vm706, %vm786
      %vm803 = vmand %vm707, %vm787
      %vm804 = vmand %vm708, %vm788
      %vm805 = vmand %vm709, %vm789
      %vm806 = vcmp.le.f32.partialorder %v646, 15.0
      %vm807 = vcmp.le.f32.partialorder %v647, 15.0
      %vm808 = vcmp.le.f32.partialorder %v648, 15.0
      %vm809 = vcmp.le.f32.partialorder %v649, 15.0
      %vm810 = vcmp.le.f32.partialorder %v650, 15.0
      %vm811 = vcmp.le.f32.partialorder %v651, 15.0
      %vm812 = vcmp.le.f32.partialorder %v652, 15.0
      %vm813 = vcmp.le.f32.partialorder %v653, 15.0
      %vm814 = vcmp.le.f32.partialorder %v654, 15.0
      %vm815 = vcmp.le.f32.partialorder %v655, 15.0
      %vm816 = vcmp.le.f32.partialorder %v656, 15.0
      %vm817 = vcmp.le.f32.partialorder %v657, 15.0
      %vm818 = vcmp.le.f32.partialorder %v658, 15.0
      %vm819 = vcmp.le.f32.partialorder %v659, 15.0
      %vm820 = vcmp.le.f32.partialorder %v660, 15.0
      %vm821 = vcmp.le.f32.partialorder %v661, 15.0
      %v822 = vsel %vm806, 1, 0
      %v823 = vsel %vm807, 1, 0
      %v824 = vsel %vm808, 1, 0
      %v825 = vsel %vm809, 1, 0
      %v826 = vsel %vm810, 1, 0
      %v827 = vsel %vm811, 1, 0
      %v828 = vsel %vm812, 1, 0
      %v829 = vsel %vm813, 1, 0
      %v830 = vsel %vm814, 1, 0
      %v831 = vsel %vm815, 1, 0
      %v832 = vsel %vm816, 1, 0
      %v833 = vsel %vm817, 1, 0
      %v834 = vsel %vm818, 1, 0
      %v835 = vsel %vm819, 1, 0
      %v836 = vsel %vm820, 1, 0
      %v837 = vsel %vm821, 1, 0
      %838 = vrot.lane.b32.xlu0 %v822, 127
      %v839 = vpop.permute.xlu0 %838
      %840 = vrot.lane.b32.xlu0 %v823, 127
      %v841 = vpop.permute.xlu0 %840
      %842 = vrot.lane.b32.xlu0 %v824, 127
      %v843 = vpop.permute.xlu0 %842
      %844 = vrot.lane.b32.xlu0 %v825, 127
      %v845 = vpop.permute.xlu0 %844
      %846 = vrot.lane.b32.xlu0 %v826, 127
      %v847 = vpop.permute.xlu0 %846
      %848 = vrot.lane.b32.xlu0 %v827, 127
      %v849 = vpop.permute.xlu0 %848
      %850 = vrot.lane.b32.xlu0 %v828, 127
      %v851 = vpop.permute.xlu0 %850
      %852 = vrot.lane.b32.xlu0 %v829, 127
      %v853 = vpop.permute.xlu0 %852
      %854 = vrot.lane.b32.xlu0 %v830, 127
      %v855 = vpop.permute.xlu0 %854
      %856 = vrot.lane.b32.xlu0 %v831, 127
      %v857 = vpop.permute.xlu0 %856
      %858 = vrot.lane.b32.xlu0 %v832, 127
      %v859 = vpop.permute.xlu0 %858
      %860 = vrot.lane.b32.xlu0 %v833, 127
      %v861 = vpop.permute.xlu0 %860
      %862 = vrot.lane.b32.xlu0 %v834, 127
      %v863 = vpop.permute.xlu0 %862
      %864 = vrot.lane.b32.xlu0 %v835, 127
      %v865 = vpop.permute.xlu0 %864
      %866 = vrot.lane.b32.xlu0 %v836, 127
      %v867 = vpop.permute.xlu0 %866
      %868 = vrot.lane.b32.xlu0 %v837, 127
      %v869 = vpop.permute.xlu0 %868
      %vm870 = vcmp.ne.s32.totalorder %v839, 0
      %vm871 = vcmp.ne.s32.totalorder %v841, 0
      %vm872 = vcmp.ne.s32.totalorder %v843, 0
      %vm873 = vcmp.ne.s32.totalorder %v845, 0
      %vm874 = vcmp.ne.s32.totalorder %v847, 0
      %vm875 = vcmp.ne.s32.totalorder %v849, 0
      %vm876 = vcmp.ne.s32.totalorder %v851, 0
      %vm877 = vcmp.ne.s32.totalorder %v853, 0
      %vm878 = vcmp.ne.s32.totalorder %v855, 0
      %vm879 = vcmp.ne.s32.totalorder %v857, 0
      %vm880 = vcmp.ne.s32.totalorder %v859, 0
      %vm881 = vcmp.ne.s32.totalorder %v861, 0
      %vm882 = vcmp.ne.s32.totalorder %v863, 0
      %vm883 = vcmp.ne.s32.totalorder %v865, 0
      %vm884 = vcmp.ne.s32.totalorder %v867, 0
      %vm885 = vcmp.ne.s32.totalorder %v869, 0
      %vm886 = vmand %vm790, %vm870
      %vm887 = vmand %vm791, %vm871
      %vm888 = vmand %vm792, %vm872
      %vm889 = vmand %vm793, %vm873
      %vm890 = vmand %vm794, %vm874
      %vm891 = vmand %vm795, %vm875
      %vm892 = vmand %vm796, %vm876
      %vm893 = vmand %vm797, %vm877
      %vm894 = vmand %vm798, %vm878
      %vm895 = vmand %vm799, %vm879
      %vm896 = vmand %vm800, %vm880
      %vm897 = vmand %vm801, %vm881
      %vm898 = vmand %vm802, %vm882
      %vm899 = vmand %vm803, %vm883
      %vm900 = vmand %vm804, %vm884
      %vm901 = vmand %vm805, %vm885
      %v902 = vmax.f32 %v598, 0.0
      %v903 = vmax.f32 %v599, 0.0
      %v904 = vmax.f32 %v600, 0.0
      %v905 = vmax.f32 %v601, 0.0
      %v906 = vmax.f32 %v602, 0.0
      %v907 = vmax.f32 %v603, 0.0
      %v908 = vmax.f32 %v604, 0.0
      %v909 = vmax.f32 %v605, 0.0
      %v910 = vmax.f32 %v606, 0.0
      %v911 = vmax.f32 %v607, 0.0
      %v912 = vmax.f32 %v608, 0.0
      %v913 = vmax.f32 %v609, 0.0
      %v914 = vmax.f32 %v610, 0.0
      %v915 = vmax.f32 %v611, 0.0
      %v916 = vmax.f32 %v612, 0.0
      %v917 = vmax.f32 %v613, 0.0
      %v918 = vmin.f32 %v902, 15.0
      %v919 = vmin.f32 %v903, 15.0
      %v920 = vmin.f32 %v904, 15.0
      %v921 = vmin.f32 %v905, 15.0
      %v922 = vmin.f32 %v906, 15.0
      %v923 = vmin.f32 %v907, 15.0
      %v924 = vmin.f32 %v908, 15.0
      %v925 = vmin.f32 %v909, 15.0
      %v926 = vmin.f32 %v910, 15.0
      %v927 = vmin.f32 %v911, 15.0
      %v928 = vmin.f32 %v912, 15.0
      %v929 = vmin.f32 %v913, 15.0
      %v930 = vmin.f32 %v914, 15.0
      %v931 = vmin.f32 %v915, 15.0
      %v932 = vmin.f32 %v916, 15.0
      %v933 = vmin.f32 %v917, 15.0
      %v934 = vcvt.f32.s32.to.zero.pseudo %v918
      %v935 = vcvt.f32.s32.to.zero.pseudo %v919
      %v936 = vcvt.f32.s32.to.zero.pseudo %v920
      %v937 = vcvt.f32.s32.to.zero.pseudo %v921
      %v938 = vcvt.f32.s32.to.zero.pseudo %v922
      %v939 = vcvt.f32.s32.to.zero.pseudo %v923
      %v940 = vcvt.f32.s32.to.zero.pseudo %v924
      %v941 = vcvt.f32.s32.to.zero.pseudo %v925
      %v942 = vcvt.f32.s32.to.zero.pseudo %v926
      %v943 = vcvt.f32.s32.to.zero.pseudo %v927
      %v944 = vcvt.f32.s32.to.zero.pseudo %v928
      %v945 = vcvt.f32.s32.to.zero.pseudo %v929
      %v946 = vcvt.f32.s32.to.zero.pseudo %v930
      %v947 = vcvt.f32.s32.to.zero.pseudo %v931
      %v948 = vcvt.f32.s32.to.zero.pseudo %v932
      %v949 = vcvt.f32.s32.to.zero.pseudo %v933
      %v950 = vmax.f32 %v646, 0.0
      %v951 = vmax.f32 %v647, 0.0
      %v952 = vmax.f32 %v648, 0.0
      %v953 = vmax.f32 %v649, 0.0
      %v954 = vmax.f32 %v650, 0.0
      %v955 = vmax.f32 %v651, 0.0
      %v956 = vmax.f32 %v652, 0.0
      %v957 = vmax.f32 %v653, 0.0
      %v958 = vmax.f32 %v654, 0.0
      %v959 = vmax.f32 %v655, 0.0
      %v960 = vmax.f32 %v656, 0.0
      %v961 = vmax.f32 %v657, 0.0
      %v962 = vmax.f32 %v658, 0.0
      %v963 = vmax.f32 %v659, 0.0
      %v964 = vmax.f32 %v660, 0.0
      %v965 = vmax.f32 %v661, 0.0
      %v966 = vmin.f32 %v950, 15.0
      %v967 = vmin.f32 %v951, 15.0
      %v968 = vmin.f32 %v952, 15.0
      %v969 = vmin.f32 %v953, 15.0
      %v970 = vmin.f32 %v954, 15.0
      %v971 = vmin.f32 %v955, 15.0
      %v972 = vmin.f32 %v956, 15.0
      %v973 = vmin.f32 %v957, 15.0
      %v974 = vmin.f32 %v958, 15.0
      %v975 = vmin.f32 %v959, 15.0
      %v976 = vmin.f32 %v960, 15.0
      %v977 = vmin.f32 %v961, 15.0
      %v978 = vmin.f32 %v962, 15.0
      %v979 = vmin.f32 %v963, 15.0
      %v980 = vmin.f32 %v964, 15.0
      %v981 = vmin.f32 %v965, 15.0
      %v982 = vcvt.f32.s32.to.zero.pseudo %v966
      %v983 = vcvt.f32.s32.to.zero.pseudo %v967
      %v984 = vcvt.f32.s32.to.zero.pseudo %v968
      %v985 = vcvt.f32.s32.to.zero.pseudo %v969
      %v986 = vcvt.f32.s32.to.zero.pseudo %v970
      %v987 = vcvt.f32.s32.to.zero.pseudo %v971
      %v988 = vcvt.f32.s32.to.zero.pseudo %v972
      %v989 = vcvt.f32.s32.to.zero.pseudo %v973
      %v990 = vcvt.f32.s32.to.zero.pseudo %v974
      %v991 = vcvt.f32.s32.to.zero.pseudo %v975
      %v992 = vcvt.f32.s32.to.zero.pseudo %v976
      %v993 = vcvt.f32.s32.to.zero.pseudo %v977
      %v994 = vcvt.f32.s32.to.zero.pseudo %v978
      %v995 = vcvt.f32.s32.to.zero.pseudo %v979
      %v996 = vcvt.f32.s32.to.zero.pseudo %v980
      %v997 = vcvt.f32.s32.to.zero.pseudo %v981
      %v998 = vmul.u32 %v982, 16
      %v999 = vmul.u32 %v983, 16
      %v1000 = vmul.u32 %v984, 16
      %v1001 = vmul.u32 %v985, 16
      %v1002 = vmul.u32 %v986, 16
      %v1003 = vmul.u32 %v987, 16
      %v1004 = vmul.u32 %v988, 16
      %v1005 = vmul.u32 %v989, 16
      %v1006 = vmul.u32 %v990, 16
      %v1007 = vmul.u32 %v991, 16
      %v1008 = vmul.u32 %v992, 16
      %v1009 = vmul.u32 %v993, 16
      %v1010 = vmul.u32 %v994, 16
      %v1011 = vmul.u32 %v995, 16
      %v1012 = vmul.u32 %v996, 16
      %v1013 = vmul.u32 %v997, 16
      %1014 = vrot.lane.b32.xlu0 %v934, 1
      %v1015 = vpop.permute.xlu0 %1014
      %1016 = vrot.lane.b32.xlu0 %v935, 1
      %v1017 = vpop.permute.xlu0 %1016
      %1018 = vrot.lane.b32.xlu0 %v936, 1
      %v1019 = vpop.permute.xlu0 %1018
      %1020 = vrot.lane.b32.xlu0 %v937, 1
      %v1021 = vpop.permute.xlu0 %1020
      %1022 = vrot.lane.b32.xlu0 %v938, 1
      %v1023 = vpop.permute.xlu0 %1022
      %1024 = vrot.lane.b32.xlu0 %v939, 1
      %v1025 = vpop.permute.xlu0 %1024
      %1026 = vrot.lane.b32.xlu0 %v940, 1
      %v1027 = vpop.permute.xlu0 %1026
      %1028 = vrot.lane.b32.xlu0 %v941, 1
      %v1029 = vpop.permute.xlu0 %1028
      %1030 = vrot.lane.b32.xlu0 %v942, 1
      %v1031 = vpop.permute.xlu0 %1030
      %1032 = vrot.lane.b32.xlu0 %v943, 1
      %v1033 = vpop.permute.xlu0 %1032
      %1034 = vrot.lane.b32.xlu0 %v944, 1
      %v1035 = vpop.permute.xlu0 %1034
      %1036 = vrot.lane.b32.xlu0 %v945, 1
      %v1037 = vpop.permute.xlu0 %1036
      %1038 = vrot.lane.b32.xlu0 %v946, 1
      %v1039 = vpop.permute.xlu0 %1038
      %1040 = vrot.lane.b32.xlu0 %v947, 1
      %v1041 = vpop.permute.xlu0 %1040
      %1042 = vrot.lane.b32.xlu0 %v948, 1
      %v1043 = vpop.permute.xlu0 %1042
      %1044 = vrot.lane.b32.xlu0 %v949, 1
      %v1045 = vpop.permute.xlu0 %1044
      %v1046 = vadd.s32 %v998, %v1015
      %v1047 = vadd.s32 %v999, %v1017
      %v1048 = vadd.s32 %v1000, %v1019
      %v1049 = vadd.s32 %v1001, %v1021
      %v1050 = vadd.s32 %v1002, %v1023
      %v1051 = vadd.s32 %v1003, %v1025
      %v1052 = vadd.s32 %v1004, %v1027
      %v1053 = vadd.s32 %v1005, %v1029
      %v1054 = vadd.s32 %v1006, %v1031
      %v1055 = vadd.s32 %v1007, %v1033
      %v1056 = vadd.s32 %v1008, %v1035
      %v1057 = vadd.s32 %v1009, %v1037
      %v1058 = vadd.s32 %v1010, %v1039
      %v1059 = vadd.s32 %v1011, %v1041
      %v1060 = vadd.s32 %v1012, %v1043
      %v1061 = vadd.s32 %v1013, %v1045
      %1062 = vrot.lane.b32.xlu0 %v1046, 127
      %v1063 = vpop.permute.xlu0 %1062
      %1064 = vrot.lane.b32.xlu0 %v1047, 127
      %v1065 = vpop.permute.xlu0 %1064
      %1066 = vrot.lane.b32.xlu0 %v1048, 127
      %v1067 = vpop.permute.xlu0 %1066
      %1068 = vrot.lane.b32.xlu0 %v1049, 127
      %v1069 = vpop.permute.xlu0 %1068
      %1070 = vrot.lane.b32.xlu0 %v1050, 127
      %v1071 = vpop.permute.xlu0 %1070
      %1072 = vrot.lane.b32.xlu0 %v1051, 127
      %v1073 = vpop.permute.xlu0 %1072
      %1074 = vrot.lane.b32.xlu0 %v1052, 127
      %v1075 = vpop.permute.xlu0 %1074
      %1076 = vrot.lane.b32.xlu0 %v1053, 127
      %v1077 = vpop.permute.xlu0 %1076
      %1078 = vrot.lane.b32.xlu0 %v1054, 127
      %v1079 = vpop.permute.xlu0 %1078
      %1080 = vrot.lane.b32.xlu0 %v1055, 127
      %v1081 = vpop.permute.xlu0 %1080
      %1082 = vrot.lane.b32.xlu0 %v1056, 127
      %v1083 = vpop.permute.xlu0 %1082
      %1084 = vrot.lane.b32.xlu0 %v1057, 127
      %v1085 = vpop.permute.xlu0 %1084
      %1086 = vrot.lane.b32.xlu0 %v1058, 127
      %v1087 = vpop.permute.xlu0 %1086
      %1088 = vrot.lane.b32.xlu0 %v1059, 127
      %v1089 = vpop.permute.xlu0 %1088
      %1090 = vrot.lane.b32.xlu0 %v1060, 127
      %v1091 = vpop.permute.xlu0 %1090
      %1092 = vrot.lane.b32.xlu0 %v1061, 127
      %v1093 = vpop.permute.xlu0 %1092
      %v1094 = vsel %vm886, %v1063, 4294967295
      %v1095 = vsel %vm887, %v1065, 4294967295
      %v1096 = vsel %vm888, %v1067, 4294967295
      %v1097 = vsel %vm889, %v1069, 4294967295
      %v1098 = vsel %vm890, %v1071, 4294967295
      %v1099 = vsel %vm891, %v1073, 4294967295
      %v1100 = vsel %vm892, %v1075, 4294967295
      %v1101 = vsel %vm893, %v1077, 4294967295
      %v1102 = vsel %vm894, %v1079, 4294967295
      %v1103 = vsel %vm895, %v1081, 4294967295
      %v1104 = vsel %vm896, %v1083, 4294967295
      %v1105 = vsel %vm897, %v1085, 4294967295
      %v1106 = vsel %vm898, %v1087, 4294967295
      %v1107 = vsel %vm899, %v1089, 4294967295
      %v1108 = vsel %vm900, %v1091, 4294967295
      %v1109 = vsel %vm901, %v1093, 4294967295
      %s1110 = smul.u32 %s23, 256
      %v1111 = vstv %s1110
      %v1112 = vsub.s32 %v1094, %v1111
      %v1113 = vsub.s32 %v1095, %v1111
      %v1114 = vsub.s32 %v1096, %v1111
      %v1115 = vsub.s32 %v1097, %v1111
      %v1116 = vsub.s32 %v1098, %v1111
      %v1117 = vsub.s32 %v1099, %v1111
      %v1118 = vsub.s32 %v1100, %v1111
      %v1119 = vsub.s32 %v1101, %v1111
      %v1120 = vsub.s32 %v1102, %v1111
      %v1121 = vsub.s32 %v1103, %v1111
      %v1122 = vsub.s32 %v1104, %v1111
      %v1123 = vsub.s32 %v1105, %v1111
      %v1124 = vsub.s32 %v1106, %v1111
      %v1125 = vsub.s32 %v1107, %v1111
      %v1126 = vsub.s32 %v1108, %v1111
      %v1127 = vsub.s32 %v1109, %v1111
      %v1128 = vld [vmem:[%s1] sm:$0xff]
      %v1129 = vld [vmem:[%s1 + $0x8] sm:$0xff]
      %v1130 = vld [vmem:[%s1 + $0x10] sm:$0xff]
      %v1131 = vld [vmem:[%s1 + $0x18] sm:$0xff]
      %v1132 = vld [vmem:[%s1 + $0x20] sm:$0xff]
      %v1133 = vld [vmem:[%s1 + $0x28] sm:$0xff]
      %v1134 = vld [vmem:[%s1 + $0x30] sm:$0xff]
      %v1135 = vld [vmem:[%s1 + $0x38] sm:$0xff]
      %v1136 = vld [vmem:[%s1 + $0x40] sm:$0xff]
      %v1137 = vld [vmem:[%s1 + $0x48] sm:$0xff]
      %v1138 = vld [vmem:[%s1 + $0x50] sm:$0xff]
      %v1139 = vld [vmem:[%s1 + $0x58] sm:$0xff]
      %v1140 = vld [vmem:[%s1 + $0x60] sm:$0xff]
      %v1141 = vld [vmem:[%s1 + $0x68] sm:$0xff]
      %v1142 = vld [vmem:[%s1 + $0x70] sm:$0xff]
      %v1143 = vld [vmem:[%s1 + $0x78] sm:$0xff]
      %v1144 = vld [vmem:[%s1 + $0x80] sm:$0xff]
      %v1145 = vld [vmem:[%s1 + $0x88] sm:$0xff]
      %v1146 = vld [vmem:[%s1 + $0x90] sm:$0xff]
      %v1147 = vld [vmem:[%s1 + $0x98] sm:$0xff]
      %v1148 = vld [vmem:[%s1 + $0xa0] sm:$0xff]
      %v1149 = vld [vmem:[%s1 + $0xa8] sm:$0xff]
      %v1150 = vld [vmem:[%s1 + $0xb0] sm:$0xff]
      %v1151 = vld [vmem:[%s1 + $0xb8] sm:$0xff]
      %v1152 = vld [vmem:[%s1 + $0xc0] sm:$0xff]
      %v1153 = vld [vmem:[%s1 + $0xc8] sm:$0xff]
      %v1154 = vld [vmem:[%s1 + $0xd0] sm:$0xff]
      %v1155 = vld [vmem:[%s1 + $0xd8] sm:$0xff]
      %v1156 = vld [vmem:[%s1 + $0xe0] sm:$0xff]
      %v1157 = vld [vmem:[%s1 + $0xe8] sm:$0xff]
      %v1158 = vld [vmem:[%s1 + $0xf0] sm:$0xff]
      %v1159 = vld [vmem:[%s1 + $0xf8] sm:$0xff]
      %1160 = vset.pattern.permute.xlu0 0
      %1161 = vperm.xlu0 %1160, %v1112
      %v1162 = vpop.permute.xlu0 %1161
      %1163 = vset.pattern.permute.xlu0 0
      %1164 = vperm.xlu0 %1163, %v1113
      %v1165 = vpop.permute.xlu0 %1164
      %1166 = vset.pattern.permute.xlu0 0
      %1167 = vperm.xlu0 %1166, %v1114
      %v1168 = vpop.permute.xlu0 %1167
      %1169 = vset.pattern.permute.xlu0 0
      %1170 = vperm.xlu0 %1169, %v1115
      %v1171 = vpop.permute.xlu0 %1170
      %1172 = vset.pattern.permute.xlu0 0
      %1173 = vperm.xlu0 %1172, %v1116
      %v1174 = vpop.permute.xlu0 %1173
      %1175 = vset.pattern.permute.xlu0 0
      %1176 = vperm.xlu0 %1175, %v1117
      %v1177 = vpop.permute.xlu0 %1176
      %1178 = vset.pattern.permute.xlu0 0
      %1179 = vperm.xlu0 %1178, %v1118
      %v1180 = vpop.permute.xlu0 %1179
      %1181 = vset.pattern.permute.xlu0 0
      %1182 = vperm.xlu0 %1181, %v1119
      %v1183 = vpop.permute.xlu0 %1182
      %1184 = vset.pattern.permute.xlu0 0
      %1185 = vperm.xlu0 %1184, %v1120
      %v1186 = vpop.permute.xlu0 %1185
      %1187 = vset.pattern.permute.xlu0 0
      %1188 = vperm.xlu0 %1187, %v1121
      %v1189 = vpop.permute.xlu0 %1188
      %1190 = vset.pattern.permute.xlu0 0
      %1191 = vperm.xlu0 %1190, %v1122
      %v1192 = vpop.permute.xlu0 %1191
      %1193 = vset.pattern.permute.xlu0 0
      %1194 = vperm.xlu0 %1193, %v1123
      %v1195 = vpop.permute.xlu0 %1194
      %1196 = vset.pattern.permute.xlu0 0
      %1197 = vperm.xlu0 %1196, %v1124
      %v1198 = vpop.permute.xlu0 %1197
      %1199 = vset.pattern.permute.xlu0 0
      %1200 = vperm.xlu0 %1199, %v1125
      %v1201 = vpop.permute.xlu0 %1200
      %1202 = vset.pattern.permute.xlu0 0
      %1203 = vperm.xlu0 %1202, %v1126
      %v1204 = vpop.permute.xlu0 %1203
      %1205 = vset.pattern.permute.xlu0 0
      %1206 = vperm.xlu0 %1205, %v1127
      %v1207 = vpop.permute.xlu0 %1206
      %vm1208 = vcmp.eq.s32.totalorder %v1128, %v1162
      %vm1209 = vcmp.eq.s32.totalorder %v1129, %v1162
      %vm1210 = vcmp.eq.s32.totalorder %v1130, %v1165
      %vm1211 = vcmp.eq.s32.totalorder %v1131, %v1165
      %vm1212 = vcmp.eq.s32.totalorder %v1132, %v1168
      %vm1213 = vcmp.eq.s32.totalorder %v1133, %v1168
      %vm1214 = vcmp.eq.s32.totalorder %v1134, %v1171
      %vm1215 = vcmp.eq.s32.totalorder %v1135, %v1171
      %vm1216 = vcmp.eq.s32.totalorder %v1136, %v1174
      %vm1217 = vcmp.eq.s32.totalorder %v1137, %v1174
      %vm1218 = vcmp.eq.s32.totalorder %v1138, %v1177
      %vm1219 = vcmp.eq.s32.totalorder %v1139, %v1177
      %vm1220 = vcmp.eq.s32.totalorder %v1140, %v1180
      %vm1221 = vcmp.eq.s32.totalorder %v1141, %v1180
      %vm1222 = vcmp.eq.s32.totalorder %v1142, %v1183
      %vm1223 = vcmp.eq.s32.totalorder %v1143, %v1183
      %vm1224 = vcmp.eq.s32.totalorder %v1144, %v1186
      %vm1225 = vcmp.eq.s32.totalorder %v1145, %v1186
      %vm1226 = vcmp.eq.s32.totalorder %v1146, %v1189
      %vm1227 = vcmp.eq.s32.totalorder %v1147, %v1189
      %vm1228 = vcmp.eq.s32.totalorder %v1148, %v1192
      %vm1229 = vcmp.eq.s32.totalorder %v1149, %v1192
      %vm1230 = vcmp.eq.s32.totalorder %v1150, %v1195
      %vm1231 = vcmp.eq.s32.totalorder %v1151, %v1195
      %vm1232 = vcmp.eq.s32.totalorder %v1152, %v1198
      %vm1233 = vcmp.eq.s32.totalorder %v1153, %v1198
      %vm1234 = vcmp.eq.s32.totalorder %v1154, %v1201
      %vm1235 = vcmp.eq.s32.totalorder %v1155, %v1201
      %vm1236 = vcmp.eq.s32.totalorder %v1156, %v1204
      %vm1237 = vcmp.eq.s32.totalorder %v1157, %v1204
      %vm1238 = vcmp.eq.s32.totalorder %v1158, %v1207
      %vm1239 = vcmp.eq.s32.totalorder %v1159, %v1207
      %v1240 = vsel %vm1208, 1.0, 0.0
      %v1241 = vsel %vm1209, 1.0, 0.0
      %v1242 = vsel %vm1210, 1.0, 0.0
      %v1243 = vsel %vm1211, 1.0, 0.0
      %v1244 = vsel %vm1212, 1.0, 0.0
      %v1245 = vsel %vm1213, 1.0, 0.0
      %v1246 = vsel %vm1214, 1.0, 0.0
      %v1247 = vsel %vm1215, 1.0, 0.0
      %v1248 = vsel %vm1216, 1.0, 0.0
      %v1249 = vsel %vm1217, 1.0, 0.0
      %v1250 = vsel %vm1218, 1.0, 0.0
      %v1251 = vsel %vm1219, 1.0, 0.0
      %v1252 = vsel %vm1220, 1.0, 0.0
      %v1253 = vsel %vm1221, 1.0, 0.0
      %v1254 = vsel %vm1222, 1.0, 0.0
      %v1255 = vsel %vm1223, 1.0, 0.0
      %v1256 = vsel %vm1224, 1.0, 0.0
      %v1257 = vsel %vm1225, 1.0, 0.0
      %v1258 = vsel %vm1226, 1.0, 0.0
      %v1259 = vsel %vm1227, 1.0, 0.0
      %v1260 = vsel %vm1228, 1.0, 0.0
      %v1261 = vsel %vm1229, 1.0, 0.0
      %v1262 = vsel %vm1230, 1.0, 0.0
      %v1263 = vsel %vm1231, 1.0, 0.0
      %v1264 = vsel %vm1232, 1.0, 0.0
      %v1265 = vsel %vm1233, 1.0, 0.0
      %v1266 = vsel %vm1234, 1.0, 0.0
      %v1267 = vsel %vm1235, 1.0, 0.0
      %v1268 = vsel %vm1236, 1.0, 0.0
      %v1269 = vsel %vm1237, 1.0, 0.0
      %v1270 = vsel %vm1238, 1.0, 0.0
      %v1271 = vsel %vm1239, 1.0, 0.0
      %v1272 = vld [vmem:[#allocation2] sm:$0xff]
      %v1273 = vld [vmem:[#allocation2 + $0x8] sm:$0xff]
      %v1274 = vld [vmem:[#allocation2 + $0x10] sm:$0xff]
      %v1275 = vld [vmem:[#allocation2 + $0x18] sm:$0xff]
      %v1276 = vld [vmem:[#allocation2 + $0x20] sm:$0xff]
      %v1277 = vld [vmem:[#allocation2 + $0x28] sm:$0xff]
      %v1278 = vld [vmem:[#allocation2 + $0x30] sm:$0xff]
      %v1279 = vld [vmem:[#allocation2 + $0x38] sm:$0xff]
      %v1280 = vld [vmem:[#allocation2 + $0x40] sm:$0xff]
      %v1281 = vld [vmem:[#allocation2 + $0x48] sm:$0xff]
      %v1282 = vld [vmem:[#allocation2 + $0x50] sm:$0xff]
      %v1283 = vld [vmem:[#allocation2 + $0x58] sm:$0xff]
      %v1284 = vld [vmem:[#allocation2 + $0x60] sm:$0xff]
      %v1285 = vld [vmem:[#allocation2 + $0x68] sm:$0xff]
      %v1286 = vld [vmem:[#allocation2 + $0x70] sm:$0xff]
      %v1287 = vld [vmem:[#allocation2 + $0x78] sm:$0xff]
      %v1288 = vld [vmem:[%s282] sm:$0xff]
      %v1289 = vld [vmem:[%s282 + $0x8] sm:$0xff]
      %v1290 = vld [vmem:[%s282 + $0x10] sm:$0xff]
      %v1291 = vld [vmem:[%s282 + $0x18] sm:$0xff]
      %v1292 = vld [vmem:[%s282 + $0x20] sm:$0xff]
      %v1293 = vld [vmem:[%s282 + $0x28] sm:$0xff]
      %v1294 = vld [vmem:[%s282 + $0x30] sm:$0xff]
      %v1295 = vld [vmem:[%s282 + $0x38] sm:$0xff]
      %v1296 = vld [vmem:[%s282 + $0x40] sm:$0xff]
      %v1297 = vld [vmem:[%s282 + $0x48] sm:$0xff]
      %v1298 = vld [vmem:[%s282 + $0x50] sm:$0xff]
      %v1299 = vld [vmem:[%s282 + $0x58] sm:$0xff]
      %v1300 = vld [vmem:[%s282 + $0x60] sm:$0xff]
      %v1301 = vld [vmem:[%s282 + $0x68] sm:$0xff]
      %v1302 = vld [vmem:[%s282 + $0x70] sm:$0xff]
      %v1303 = vld [vmem:[%s282 + $0x78] sm:$0xff]
      %v1304 = vld [vmem:[%s282 + $0x80] sm:$0xff]
      %v1305 = vld [vmem:[%s282 + $0x88] sm:$0xff]
      %v1306 = vld [vmem:[%s282 + $0x90] sm:$0xff]
      %v1307 = vld [vmem:[%s282 + $0x98] sm:$0xff]
      %v1308 = vld [vmem:[%s282 + $0xa0] sm:$0xff]
      %v1309 = vld [vmem:[%s282 + $0xa8] sm:$0xff]
      %v1310 = vld [vmem:[%s282 + $0xb0] sm:$0xff]
      %v1311 = vld [vmem:[%s282 + $0xb8] sm:$0xff]
      %v1312 = vld [vmem:[%s282 + $0xc0] sm:$0xff]
      %v1313 = vld [vmem:[%s282 + $0xc8] sm:$0xff]
      %v1314 = vld [vmem:[%s282 + $0xd0] sm:$0xff]
      %v1315 = vld [vmem:[%s282 + $0xd8] sm:$0xff]
      %v1316 = vld [vmem:[%s282 + $0xe0] sm:$0xff]
      %v1317 = vld [vmem:[%s282 + $0xe8] sm:$0xff]
      %v1318 = vld [vmem:[%s282 + $0xf0] sm:$0xff]
      %v1319 = vld [vmem:[%s282 + $0xf8] sm:$0xff]
      %1320 = vmatprep.subr.mxu0 0.0
      %1321 = vmatpush1.msra.mxu0 %v1303
      %1322 = vmatprep.subr.mxu0 0.0
      %1323 = vmatpush1.msra.mxu0 %v1302
      %1324 = vmatprep.subr.mxu0 0.0
      %1325 = vmatpush1.msra.mxu0 %v1301
      %1326 = vmatprep.subr.mxu0 0.0
      %1327 = vmatpush1.msra.mxu0 %v1300
      %1328 = vmatprep.subr.mxu0 0.0
      %1329 = vmatpush1.msra.mxu0 %v1299
      %1330 = vmatprep.subr.mxu0 0.0
      %1331 = vmatpush1.msra.mxu0 %v1298
      %1332 = vmatprep.subr.mxu0 0.0
      %1333 = vmatpush1.msra.mxu0 %v1297
      %1334 = vmatprep.subr.mxu0 0.0
      %1335 = vmatpush1.msra.mxu0 %v1296
      %1336 = vmatprep.subr.mxu0 0.0
      %1337 = vmatpush1.msra.mxu0 %v1295
      %1338 = vmatprep.subr.mxu0 0.0
      %1339 = vmatpush1.msra.mxu0 %v1294
      %1340 = vmatprep.subr.mxu0 0.0
      %1341 = vmatpush1.msra.mxu0 %v1293
      %1342 = vmatprep.subr.mxu0 0.0
      %1343 = vmatpush1.msra.mxu0 %v1292
      %1344 = vmatprep.subr.mxu0 0.0
      %1345 = vmatpush1.msra.mxu0 %v1291
      %1346 = vmatprep.subr.mxu0 0.0
      %1347 = vmatpush1.msra.mxu0 %v1290
      %1348 = vmatprep.subr.mxu0 0.0
      %1349 = vmatpush1.msra.mxu0 %v1289
      %1350 = vmatprep.subr.mxu0 0.0
      %1351 = vmatpush1.msra.mxu0 %v1288
      %1352 = vmatprep.subr.mxu0 0.0
      %1353 = vmatpush2.msra.mxu0 %v1319
      %1354 = vmatprep.subr.mxu0 0.0
      %1355 = vmatpush2.msra.mxu0 %v1318
      %1356 = vmatprep.subr.mxu0 0.0
      %1357 = vmatpush2.msra.mxu0 %v1317
      %1358 = vmatprep.subr.mxu0 0.0
      %1359 = vmatpush2.msra.mxu0 %v1316
      %1360 = vmatprep.subr.mxu0 0.0
      %1361 = vmatpush2.msra.mxu0 %v1315
      %1362 = vmatprep.subr.mxu0 0.0
      %1363 = vmatpush2.msra.mxu0 %v1314
      %1364 = vmatprep.subr.mxu0 0.0
      %1365 = vmatpush2.msra.mxu0 %v1313
      %1366 = vmatprep.subr.mxu0 0.0
      %1367 = vmatpush2.msra.mxu0 %v1312
      %1368 = vmatprep.subr.mxu0 0.0
      %1369 = vmatpush2.msra.mxu0 %v1311
      %1370 = vmatprep.subr.mxu0 0.0
      %1371 = vmatpush2.msra.mxu0 %v1310
      %1372 = vmatprep.subr.mxu0 0.0
      %1373 = vmatpush2.msra.mxu0 %v1309
      %1374 = vmatprep.subr.mxu0 0.0
      %1375 = vmatpush2.msra.mxu0 %v1308
      %1376 = vmatprep.subr.mxu0 0.0
      %1377 = vmatpush2.msra.mxu0 %v1307
      %1378 = vmatprep.subr.mxu0 0.0
      %1379 = vmatpush2.msra.mxu0 %v1306
      %1380 = vmatprep.subr.mxu0 0.0
      %1381 = vmatpush2.msra.mxu0 %v1305
      %1382 = vmatprep.subr.mxu0 0.0
      %1383 = vmatpush2.msra.mxu0 %v1304
      %1384 = vmatprep.mubr.f32.mxu0 %v1241
      %1385 = vmatmul.mubr.f32.gmra.mxu0 %v1240
      %v1386 = vpop.f32.mrf.mxu0
      %v1387 = vadd.f32 0.0, %v1386
      %v1388 = vpop.f32.mrf.mxu0
      %1389 = vmatprep.mubr.f32.mxu0 %v1243
      %1390 = vmatmul.mubr.f32.gmra.mxu0 %v1242
      %v1391 = vpop.f32.mrf.mxu0
      %v1392 = vadd.f32 0.0, %v1391
      %v1393 = vpop.f32.mrf.mxu0
      %1394 = vmatprep.mubr.f32.mxu0 %v1245
      %1395 = vmatmul.mubr.f32.gmra.mxu0 %v1244
      %v1396 = vpop.f32.mrf.mxu0
      %v1397 = vadd.f32 0.0, %v1396
      %v1398 = vpop.f32.mrf.mxu0
      %1399 = vmatprep.mubr.f32.mxu0 %v1247
      %1400 = vmatmul.mubr.f32.gmra.mxu0 %v1246
      %v1401 = vpop.f32.mrf.mxu0
      %v1402 = vadd.f32 0.0, %v1401
      %v1403 = vpop.f32.mrf.mxu0
      %1404 = vmatprep.mubr.f32.mxu0 %v1249
      %1405 = vmatmul.mubr.f32.gmra.mxu0 %v1248
      %v1406 = vpop.f32.mrf.mxu0
      %v1407 = vadd.f32 0.0, %v1406
      %v1408 = vpop.f32.mrf.mxu0
      %1409 = vmatprep.mubr.f32.mxu0 %v1251
      %1410 = vmatmul.mubr.f32.gmra.mxu0 %v1250
      %v1411 = vpop.f32.mrf.mxu0
      %v1412 = vadd.f32 0.0, %v1411
      %v1413 = vpop.f32.mrf.mxu0
      %1414 = vmatprep.mubr.f32.mxu0 %v1253
      %1415 = vmatmul.mubr.f32.gmra.mxu0 %v1252
      %v1416 = vpop.f32.mrf.mxu0
      %v1417 = vadd.f32 0.0, %v1416
      %v1418 = vpop.f32.mrf.mxu0
      %1419 = vmatprep.mubr.f32.mxu0 %v1255
      %1420 = vmatmul.mubr.f32.gmra.mxu0 %v1254
      %v1421 = vpop.f32.mrf.mxu0
      %v1422 = vadd.f32 0.0, %v1421
      %v1423 = vpop.f32.mrf.mxu0
      %1424 = vmatprep.mubr.f32.mxu0 %v1257
      %1425 = vmatmul.mubr.f32.gmra.mxu0 %v1256
      %v1426 = vpop.f32.mrf.mxu0
      %v1427 = vadd.f32 0.0, %v1426
      %v1428 = vpop.f32.mrf.mxu0
      %1429 = vmatprep.mubr.f32.mxu0 %v1259
      %1430 = vmatmul.mubr.f32.gmra.mxu0 %v1258
      %v1431 = vpop.f32.mrf.mxu0
      %v1432 = vadd.f32 0.0, %v1431
      %v1433 = vpop.f32.mrf.mxu0
      %1434 = vmatprep.mubr.f32.mxu0 %v1261
      %1435 = vmatmul.mubr.f32.gmra.mxu0 %v1260
      %v1436 = vpop.f32.mrf.mxu0
      %v1437 = vadd.f32 0.0, %v1436
      %v1438 = vpop.f32.mrf.mxu0
      %1439 = vmatprep.mubr.f32.mxu0 %v1263
      %1440 = vmatmul.mubr.f32.gmra.mxu0 %v1262
      %v1441 = vpop.f32.mrf.mxu0
      %v1442 = vadd.f32 0.0, %v1441
      %v1443 = vpop.f32.mrf.mxu0
      %1444 = vmatprep.mubr.f32.mxu0 %v1265
      %1445 = vmatmul.mubr.f32.gmra.mxu0 %v1264
      %v1446 = vpop.f32.mrf.mxu0
      %v1447 = vadd.f32 0.0, %v1446
      %v1448 = vpop.f32.mrf.mxu0
      %1449 = vmatprep.mubr.f32.mxu0 %v1267
      %1450 = vmatmul.mubr.f32.gmra.mxu0 %v1266
      %v1451 = vpop.f32.mrf.mxu0
      %v1452 = vadd.f32 0.0, %v1451
      %v1453 = vpop.f32.mrf.mxu0
      %1454 = vmatprep.mubr.f32.mxu0 %v1269
      %1455 = vmatmul.mubr.f32.gmra.mxu0 %v1268
      %v1456 = vpop.f32.mrf.mxu0
      %v1457 = vadd.f32 0.0, %v1456
      %v1458 = vpop.f32.mrf.mxu0
      %1459 = vmatprep.mubr.f32.mxu0 %v1271
      %1460 = vmatmul.mubr.f32.gmra.mxu0 %v1270
      %v1461 = vpop.f32.mrf.mxu0
      %v1462 = vadd.f32 0.0, %v1461
      %v1463 = vpop.f32.mrf.mxu0
      %1464 = vdwg.mxu0
      %v1465 = vadd.f32 %v1272, %v1387
      %v1466 = vadd.f32 %v1273, %v1392
      %v1467 = vadd.f32 %v1274, %v1397
      %v1468 = vadd.f32 %v1275, %v1402
      %v1469 = vadd.f32 %v1276, %v1407
      %v1470 = vadd.f32 %v1277, %v1412
      %v1471 = vadd.f32 %v1278, %v1417
      %v1472 = vadd.f32 %v1279, %v1422
      %v1473 = vadd.f32 %v1280, %v1427
      %v1474 = vadd.f32 %v1281, %v1432
      %v1475 = vadd.f32 %v1282, %v1437
      %v1476 = vadd.f32 %v1283, %v1442
      %v1477 = vadd.f32 %v1284, %v1447
      %v1478 = vadd.f32 %v1285, %v1452
      %v1479 = vadd.f32 %v1286, %v1457
      %v1480 = vadd.f32 %v1287, %v1462
      %vm1481 = vcmask 588800
      %1482 = vst.msk [vmem:[#allocation2] sm:$0xff] %vm1481, %v1465
      %1483 = vst.msk [vmem:[#allocation2 + $0x8] sm:$0xff] %vm1481, %v1466
      %1484 = vst.msk [vmem:[#allocation2 + $0x10] sm:$0xff] %vm1481, %v1467
      %1485 = vst.msk [vmem:[#allocation2 + $0x18] sm:$0xff] %vm1481, %v1468
      %1486 = vst.msk [vmem:[#allocation2 + $0x20] sm:$0xff] %vm1481, %v1469
      %1487 = vst.msk [vmem:[#allocation2 + $0x28] sm:$0xff] %vm1481, %v1470
      %1488 = vst.msk [vmem:[#allocation2 + $0x30] sm:$0xff] %vm1481, %v1471
      %1489 = vst.msk [vmem:[#allocation2 + $0x38] sm:$0xff] %vm1481, %v1472
      %1490 = vst.msk [vmem:[#allocation2 + $0x40] sm:$0xff] %vm1481, %v1473
      %1491 = vst.msk [vmem:[#allocation2 + $0x48] sm:$0xff] %vm1481, %v1474
      %1492 = vst.msk [vmem:[#allocation2 + $0x50] sm:$0xff] %vm1481, %v1475
      %1493 = vst.msk [vmem:[#allocation2 + $0x58] sm:$0xff] %vm1481, %v1476
      %1494 = vst.msk [vmem:[#allocation2 + $0x60] sm:$0xff] %vm1481, %v1477
      %1495 = vst.msk [vmem:[#allocation2 + $0x68] sm:$0xff] %vm1481, %v1478
      %1496 = vst.msk [vmem:[#allocation2 + $0x70] sm:$0xff] %vm1481, %v1479
      %1497 = vst.msk [vmem:[#allocation2 + $0x78] sm:$0xff] %vm1481, %v1480
      // Predicated region
      $region37: #{tpu_custom_call.1} parent=31 // pred_check
        %p1498 = pneg %p304
      $region38: #{tpu_custom_call.1} parent=31 // pred_check_branch
        %1500 = sbr.rel (%p1498) target = $region40
      $region39: #{tpu_custom_call.1} parent=31 // pred_region
        %v1501 = vld [vmem:[#allocation2] sm:$0xff]
        %v1502 = vld [vmem:[#allocation2 + $0x8] sm:$0xff]
        %v1503 = vld [vmem:[#allocation2 + $0x10] sm:$0xff]
        %v1504 = vld [vmem:[#allocation2 + $0x18] sm:$0xff]
        %v1505 = vld [vmem:[#allocation2 + $0x20] sm:$0xff]
        %v1506 = vld [vmem:[#allocation2 + $0x28] sm:$0xff]
        %v1507 = vld [vmem:[#allocation2 + $0x30] sm:$0xff]
        %v1508 = vld [vmem:[#allocation2 + $0x38] sm:$0xff]
        %v1509 = vld [vmem:[#allocation2 + $0x40] sm:$0xff]
        %v1510 = vld [vmem:[#allocation2 + $0x48] sm:$0xff]
        %v1511 = vld [vmem:[#allocation2 + $0x50] sm:$0xff]
        %v1512 = vld [vmem:[#allocation2 + $0x58] sm:$0xff]
        %v1513 = vld [vmem:[#allocation2 + $0x60] sm:$0xff]
        %v1514 = vld [vmem:[#allocation2 + $0x68] sm:$0xff]
        %v1515 = vld [vmem:[#allocation2 + $0x70] sm:$0xff]
        %v1516 = vld [vmem:[#allocation2 + $0x78] sm:$0xff]
        %1517 = vst.msk [vmem:[%s292] sm:$0xff] %vm1481, %v1501
        %1518 = vst.msk [vmem:[%s292 + $0x8] sm:$0xff] %vm1481, %v1502
        %1519 = vst.msk [vmem:[%s292 + $0x10] sm:$0xff] %vm1481, %v1503
        %1520 = vst.msk [vmem:[%s292 + $0x18] sm:$0xff] %vm1481, %v1504
        %1521 = vst.msk [vmem:[%s292 + $0x20] sm:$0xff] %vm1481, %v1505
        %1522 = vst.msk [vmem:[%s292 + $0x28] sm:$0xff] %vm1481, %v1506
        %1523 = vst.msk [vmem:[%s292 + $0x30] sm:$0xff] %vm1481, %v1507
        %1524 = vst.msk [vmem:[%s292 + $0x38] sm:$0xff] %vm1481, %v1508
        %1525 = vst.msk [vmem:[%s292 + $0x40] sm:$0xff] %vm1481, %v1509
        %1526 = vst.msk [vmem:[%s292 + $0x48] sm:$0xff] %vm1481, %v1510
        %1527 = vst.msk [vmem:[%s292 + $0x50] sm:$0xff] %vm1481, %v1511
        %1528 = vst.msk [vmem:[%s292 + $0x58] sm:$0xff] %vm1481, %v1512
        %1529 = vst.msk [vmem:[%s292 + $0x60] sm:$0xff] %vm1481, %v1513
        %1530 = vst.msk [vmem:[%s292 + $0x68] sm:$0xff] %vm1481, %v1514
        %1531 = vst.msk [vmem:[%s292 + $0x70] sm:$0xff] %vm1481, %v1515
        %1532 = vst.msk [vmem:[%s292 + $0x78] sm:$0xff] %vm1481, %v1516
        %vm1533 = vcmp.gt.f32.partialorder %v325, 1e-05
        %vm1534 = vcmp.gt.f32.partialorder %v326, 1e-05
        %vm1535 = vcmp.gt.f32.partialorder %v327, 1e-05
        %vm1536 = vcmp.gt.f32.partialorder %v328, 1e-05
        %vm1537 = vcmp.gt.f32.partialorder %v329, 1e-05
        %vm1538 = vcmp.gt.f32.partialorder %v330, 1e-05
        %vm1539 = vcmp.gt.f32.partialorder %v331, 1e-05
        %vm1540 = vcmp.gt.f32.partialorder %v332, 1e-05
        %vm1541 = vcmp.gt.f32.partialorder %v333, 1e-05
        %vm1542 = vcmp.gt.f32.partialorder %v334, 1e-05
        %vm1543 = vcmp.gt.f32.partialorder %v335, 1e-05
        %vm1544 = vcmp.gt.f32.partialorder %v336, 1e-05
        %vm1545 = vcmp.gt.f32.partialorder %v337, 1e-05
        %vm1546 = vcmp.gt.f32.partialorder %v338, 1e-05
        %vm1547 = vcmp.gt.f32.partialorder %v339, 1e-05
        %vm1548 = vcmp.gt.f32.partialorder %v340, 1e-05
        %vm1549 = vcmp.gt.f32.partialorder %v454, 0.0
        %vm1550 = vcmp.gt.f32.partialorder %v455, 0.0
        %vm1551 = vcmp.gt.f32.partialorder %v456, 0.0
        %vm1552 = vcmp.gt.f32.partialorder %v457, 0.0
        %vm1553 = vcmp.gt.f32.partialorder %v458, 0.0
        %vm1554 = vcmp.gt.f32.partialorder %v459, 0.0
        %vm1555 = vcmp.gt.f32.partialorder %v460, 0.0
        %vm1556 = vcmp.gt.f32.partialorder %v461, 0.0
        %vm1557 = vcmp.gt.f32.partialorder %v462, 0.0
        %vm1558 = vcmp.gt.f32.partialorder %v463, 0.0
        %vm1559 = vcmp.gt.f32.partialorder %v464, 0.0
        %vm1560 = vcmp.gt.f32.partialorder %v465, 0.0
        %vm1561 = vcmp.gt.f32.partialorder %v466, 0.0
        %vm1562 = vcmp.gt.f32.partialorder %v467, 0.0
        %vm1563 = vcmp.gt.f32.partialorder %v468, 0.0
        %vm1564 = vcmp.gt.f32.partialorder %v469, 0.0
        %v1565 = vsel %vm1549, 1, 0
        %v1566 = vsel %vm1550, 1, 0
        %v1567 = vsel %vm1551, 1, 0
        %v1568 = vsel %vm1552, 1, 0
        %v1569 = vsel %vm1553, 1, 0
        %v1570 = vsel %vm1554, 1, 0
        %v1571 = vsel %vm1555, 1, 0
        %v1572 = vsel %vm1556, 1, 0
        %v1573 = vsel %vm1557, 1, 0
        %v1574 = vsel %vm1558, 1, 0
        %v1575 = vsel %vm1559, 1, 0
        %v1576 = vsel %vm1560, 1, 0
        %v1577 = vsel %vm1561, 1, 0
        %v1578 = vsel %vm1562, 1, 0
        %v1579 = vsel %vm1563, 1, 0
        %v1580 = vsel %vm1564, 1, 0
        %1581 = vrot.lane.b32.xlu0 %v1565, 2
        %v1582 = vpop.permute.xlu0 %1581
        %1583 = vrot.lane.b32.xlu0 %v1566, 2
        %v1584 = vpop.permute.xlu0 %1583
        %1585 = vrot.lane.b32.xlu0 %v1567, 2
        %v1586 = vpop.permute.xlu0 %1585
        %1587 = vrot.lane.b32.xlu0 %v1568, 2
        %v1588 = vpop.permute.xlu0 %1587
        %1589 = vrot.lane.b32.xlu0 %v1569, 2
        %v1590 = vpop.permute.xlu0 %1589
        %1591 = vrot.lane.b32.xlu0 %v1570, 2
        %v1592 = vpop.permute.xlu0 %1591
        %1593 = vrot.lane.b32.xlu0 %v1571, 2
        %v1594 = vpop.permute.xlu0 %1593
        %1595 = vrot.lane.b32.xlu0 %v1572, 2
        %v1596 = vpop.permute.xlu0 %1595
        %1597 = vrot.lane.b32.xlu0 %v1573, 2
        %v1598 = vpop.permute.xlu0 %1597
        %1599 = vrot.lane.b32.xlu0 %v1574, 2
        %v1600 = vpop.permute.xlu0 %1599
        %1601 = vrot.lane.b32.xlu0 %v1575, 2
        %v1602 = vpop.permute.xlu0 %1601
        %1603 = vrot.lane.b32.xlu0 %v1576, 2
        %v1604 = vpop.permute.xlu0 %1603
        %1605 = vrot.lane.b32.xlu0 %v1577, 2
        %v1606 = vpop.permute.xlu0 %1605
        %1607 = vrot.lane.b32.xlu0 %v1578, 2
        %v1608 = vpop.permute.xlu0 %1607
        %1609 = vrot.lane.b32.xlu0 %v1579, 2
        %v1610 = vpop.permute.xlu0 %1609
        %1611 = vrot.lane.b32.xlu0 %v1580, 2
        %v1612 = vpop.permute.xlu0 %1611
        %vm1613 = vcmp.ne.s32.totalorder %v1582, 0
        %vm1614 = vcmp.ne.s32.totalorder %v1584, 0
        %vm1615 = vcmp.ne.s32.totalorder %v1586, 0
        %vm1616 = vcmp.ne.s32.totalorder %v1588, 0
        %vm1617 = vcmp.ne.s32.totalorder %v1590, 0
        %vm1618 = vcmp.ne.s32.totalorder %v1592, 0
        %vm1619 = vcmp.ne.s32.totalorder %v1594, 0
        %vm1620 = vcmp.ne.s32.totalorder %v1596, 0
        %vm1621 = vcmp.ne.s32.totalorder %v1598, 0
        %vm1622 = vcmp.ne.s32.totalorder %v1600, 0
        %vm1623 = vcmp.ne.s32.totalorder %v1602, 0
        %vm1624 = vcmp.ne.s32.totalorder %v1604, 0
        %vm1625 = vcmp.ne.s32.totalorder %v1606, 0
        %vm1626 = vcmp.ne.s32.totalorder %v1608, 0
        %vm1627 = vcmp.ne.s32.totalorder %v1610, 0
        %vm1628 = vcmp.ne.s32.totalorder %v1612, 0
        %vm1629 = vmand %vm1533, %vm1613
        %vm1630 = vmand %vm1534, %vm1614
        %vm1631 = vmand %vm1535, %vm1615
        %vm1632 = vmand %vm1536, %vm1616
        %vm1633 = vmand %vm1537, %vm1617
        %vm1634 = vmand %vm1538, %vm1618
        %vm1635 = vmand %vm1539, %vm1619
        %vm1636 = vmand %vm1540, %vm1620
        %vm1637 = vmand %vm1541, %vm1621
        %vm1638 = vmand %vm1542, %vm1622
        %vm1639 = vmand %vm1543, %vm1623
        %vm1640 = vmand %vm1544, %vm1624
        %vm1641 = vmand %vm1545, %vm1625
        %vm1642 = vmand %vm1546, %vm1626
        %vm1643 = vmand %vm1547, %vm1627
        %vm1644 = vmand %vm1548, %vm1628
        %vm1645 = vcmp.lt.f32.partialorder %v454, 1.0
        %vm1646 = vcmp.lt.f32.partialorder %v455, 1.0
        %vm1647 = vcmp.lt.f32.partialorder %v456, 1.0
        %vm1648 = vcmp.lt.f32.partialorder %v457, 1.0
        %vm1649 = vcmp.lt.f32.partialorder %v458, 1.0
        %vm1650 = vcmp.lt.f32.partialorder %v459, 1.0
        %vm1651 = vcmp.lt.f32.partialorder %v460, 1.0
        %vm1652 = vcmp.lt.f32.partialorder %v461, 1.0
        %vm1653 = vcmp.lt.f32.partialorder %v462, 1.0
        %vm1654 = vcmp.lt.f32.partialorder %v463, 1.0
        %vm1655 = vcmp.lt.f32.partialorder %v464, 1.0
        %vm1656 = vcmp.lt.f32.partialorder %v465, 1.0
        %vm1657 = vcmp.lt.f32.partialorder %v466, 1.0
        %vm1658 = vcmp.lt.f32.partialorder %v467, 1.0
        %vm1659 = vcmp.lt.f32.partialorder %v468, 1.0
        %vm1660 = vcmp.lt.f32.partialorder %v469, 1.0
        %v1661 = vsel %vm1645, 1, 0
        %v1662 = vsel %vm1646, 1, 0
        %v1663 = vsel %vm1647, 1, 0
        %v1664 = vsel %vm1648, 1, 0
        %v1665 = vsel %vm1649, 1, 0
        %v1666 = vsel %vm1650, 1, 0
        %v1667 = vsel %vm1651, 1, 0
        %v1668 = vsel %vm1652, 1, 0
        %v1669 = vsel %vm1653, 1, 0
        %v1670 = vsel %vm1654, 1, 0
        %v1671 = vsel %vm1655, 1, 0
        %v1672 = vsel %vm1656, 1, 0
        %v1673 = vsel %vm1657, 1, 0
        %v1674 = vsel %vm1658, 1, 0
        %v1675 = vsel %vm1659, 1, 0
        %v1676 = vsel %vm1660, 1, 0
        %1677 = vrot.lane.b32.xlu0 %v1661, 2
        %v1678 = vpop.permute.xlu0 %1677
        %1679 = vrot.lane.b32.xlu0 %v1662, 2
        %v1680 = vpop.permute.xlu0 %1679
        %1681 = vrot.lane.b32.xlu0 %v1663, 2
        %v1682 = vpop.permute.xlu0 %1681
        %1683 = vrot.lane.b32.xlu0 %v1664, 2
        %v1684 = vpop.permute.xlu0 %1683
        %1685 = vrot.lane.b32.xlu0 %v1665, 2
        %v1686 = vpop.permute.xlu0 %1685
        %1687 = vrot.lane.b32.xlu0 %v1666, 2
        %v1688 = vpop.permute.xlu0 %1687
        %1689 = vrot.lane.b32.xlu0 %v1667, 2
        %v1690 = vpop.permute.xlu0 %1689
        %1691 = vrot.lane.b32.xlu0 %v1668, 2
        %v1692 = vpop.permute.xlu0 %1691
        %1693 = vrot.lane.b32.xlu0 %v1669, 2
        %v1694 = vpop.permute.xlu0 %1693
        %1695 = vrot.lane.b32.xlu0 %v1670, 2
        %v1696 = vpop.permute.xlu0 %1695
        %1697 = vrot.lane.b32.xlu0 %v1671, 2
        %v1698 = vpop.permute.xlu0 %1697
        %1699 = vrot.lane.b32.xlu0 %v1672, 2
        %v1700 = vpop.permute.xlu0 %1699
        %1701 = vrot.lane.b32.xlu0 %v1673, 2
        %v1702 = vpop.permute.xlu0 %1701
        %1703 = vrot.lane.b32.xlu0 %v1674, 2
        %v1704 = vpop.permute.xlu0 %1703
        %1705 = vrot.lane.b32.xlu0 %v1675, 2
        %v1706 = vpop.permute.xlu0 %1705
        %1707 = vrot.lane.b32.xlu0 %v1676, 2
        %v1708 = vpop.permute.xlu0 %1707
        %vm1709 = vcmp.ne.s32.totalorder %v1678, 0
        %vm1710 = vcmp.ne.s32.totalorder %v1680, 0
        %vm1711 = vcmp.ne.s32.totalorder %v1682, 0
        %vm1712 = vcmp.ne.s32.totalorder %v1684, 0
        %vm1713 = vcmp.ne.s32.totalorder %v1686, 0
        %vm1714 = vcmp.ne.s32.totalorder %v1688, 0
        %vm1715 = vcmp.ne.s32.totalorder %v1690, 0
        %vm1716 = vcmp.ne.s32.totalorder %v1692, 0
        %vm1717 = vcmp.ne.s32.totalorder %v1694, 0
        %vm1718 = vcmp.ne.s32.totalorder %v1696, 0
        %vm1719 = vcmp.ne.s32.totalorder %v1698, 0
        %vm1720 = vcmp.ne.s32.totalorder %v1700, 0
        %vm1721 = vcmp.ne.s32.totalorder %v1702, 0
        %vm1722 = vcmp.ne.s32.totalorder %v1704, 0
        %vm1723 = vcmp.ne.s32.totalorder %v1706, 0
        %vm1724 = vcmp.ne.s32.totalorder %v1708, 0
        %vm1725 = vmand %vm1629, %vm1709
        %vm1726 = vmand %vm1630, %vm1710
        %vm1727 = vmand %vm1631, %vm1711
        %vm1728 = vmand %vm1632, %vm1712
        %vm1729 = vmand %vm1633, %vm1713
        %vm1730 = vmand %vm1634, %vm1714
        %vm1731 = vmand %vm1635, %vm1715
        %vm1732 = vmand %vm1636, %vm1716
        %vm1733 = vmand %vm1637, %vm1717
        %vm1734 = vmand %vm1638, %vm1718
        %vm1735 = vmand %vm1639, %vm1719
        %vm1736 = vmand %vm1640, %vm1720
        %vm1737 = vmand %vm1641, %vm1721
        %vm1738 = vmand %vm1642, %vm1722
        %vm1739 = vmand %vm1643, %vm1723
        %vm1740 = vmand %vm1644, %vm1724
        %vm1741 = vcmp.gt.f32.partialorder %v550, 0.0
        %vm1742 = vcmp.gt.f32.partialorder %v551, 0.0
        %vm1743 = vcmp.gt.f32.partialorder %v552, 0.0
        %vm1744 = vcmp.gt.f32.partialorder %v553, 0.0
        %vm1745 = vcmp.gt.f32.partialorder %v554, 0.0
        %vm1746 = vcmp.gt.f32.partialorder %v555, 0.0
        %vm1747 = vcmp.gt.f32.partialorder %v556, 0.0
        %vm1748 = vcmp.gt.f32.partialorder %v557, 0.0
        %vm1749 = vcmp.gt.f32.partialorder %v558, 0.0
        %vm1750 = vcmp.gt.f32.partialorder %v559, 0.0
        %vm1751 = vcmp.gt.f32.partialorder %v560, 0.0
        %vm1752 = vcmp.gt.f32.partialorder %v561, 0.0
        %vm1753 = vcmp.gt.f32.partialorder %v562, 0.0
        %vm1754 = vcmp.gt.f32.partialorder %v563, 0.0
        %vm1755 = vcmp.gt.f32.partialorder %v564, 0.0
        %vm1756 = vcmp.gt.f32.partialorder %v565, 0.0
        %v1757 = vsel %vm1741, 1, 0
        %v1758 = vsel %vm1742, 1, 0
        %v1759 = vsel %vm1743, 1, 0
        %v1760 = vsel %vm1744, 1, 0
        %v1761 = vsel %vm1745, 1, 0
        %v1762 = vsel %vm1746, 1, 0
        %v1763 = vsel %vm1747, 1, 0
        %v1764 = vsel %vm1748, 1, 0
        %v1765 = vsel %vm1749, 1, 0
        %v1766 = vsel %vm1750, 1, 0
        %v1767 = vsel %vm1751, 1, 0
        %v1768 = vsel %vm1752, 1, 0
        %v1769 = vsel %vm1753, 1, 0
        %v1770 = vsel %vm1754, 1, 0
        %v1771 = vsel %vm1755, 1, 0
        %v1772 = vsel %vm1756, 1, 0
        %1773 = vrot.lane.b32.xlu0 %v1757, 1
        %v1774 = vpop.permute.xlu0 %1773
        %1775 = vrot.lane.b32.xlu0 %v1758, 1
        %v1776 = vpop.permute.xlu0 %1775
        %1777 = vrot.lane.b32.xlu0 %v1759, 1
        %v1778 = vpop.permute.xlu0 %1777
        %1779 = vrot.lane.b32.xlu0 %v1760, 1
        %v1780 = vpop.permute.xlu0 %1779
        %1781 = vrot.lane.b32.xlu0 %v1761, 1
        %v1782 = vpop.permute.xlu0 %1781
        %1783 = vrot.lane.b32.xlu0 %v1762, 1
        %v1784 = vpop.permute.xlu0 %1783
        %1785 = vrot.lane.b32.xlu0 %v1763, 1
        %v1786 = vpop.permute.xlu0 %1785
        %1787 = vrot.lane.b32.xlu0 %v1764, 1
        %v1788 = vpop.permute.xlu0 %1787
        %1789 = vrot.lane.b32.xlu0 %v1765, 1
        %v1790 = vpop.permute.xlu0 %1789
        %1791 = vrot.lane.b32.xlu0 %v1766, 1
        %v1792 = vpop.permute.xlu0 %1791
        %1793 = vrot.lane.b32.xlu0 %v1767, 1
        %v1794 = vpop.permute.xlu0 %1793
        %1795 = vrot.lane.b32.xlu0 %v1768, 1
        %v1796 = vpop.permute.xlu0 %1795
        %1797 = vrot.lane.b32.xlu0 %v1769, 1
        %v1798 = vpop.permute.xlu0 %1797
        %1799 = vrot.lane.b32.xlu0 %v1770, 1
        %v1800 = vpop.permute.xlu0 %1799
        %1801 = vrot.lane.b32.xlu0 %v1771, 1
        %v1802 = vpop.permute.xlu0 %1801
        %1803 = vrot.lane.b32.xlu0 %v1772, 1
        %v1804 = vpop.permute.xlu0 %1803
        %vm1805 = vcmp.ne.s32.totalorder %v1774, 0
        %vm1806 = vcmp.ne.s32.totalorder %v1776, 0
        %vm1807 = vcmp.ne.s32.totalorder %v1778, 0
        %vm1808 = vcmp.ne.s32.totalorder %v1780, 0
        %vm1809 = vcmp.ne.s32.totalorder %v1782, 0
        %vm1810 = vcmp.ne.s32.totalorder %v1784, 0
        %vm1811 = vcmp.ne.s32.totalorder %v1786, 0
        %vm1812 = vcmp.ne.s32.totalorder %v1788, 0
        %vm1813 = vcmp.ne.s32.totalorder %v1790, 0
        %vm1814 = vcmp.ne.s32.totalorder %v1792, 0
        %vm1815 = vcmp.ne.s32.totalorder %v1794, 0
        %vm1816 = vcmp.ne.s32.totalorder %v1796, 0
        %vm1817 = vcmp.ne.s32.totalorder %v1798, 0
        %vm1818 = vcmp.ne.s32.totalorder %v1800, 0
        %vm1819 = vcmp.ne.s32.totalorder %v1802, 0
        %vm1820 = vcmp.ne.s32.totalorder %v1804, 0
        %vm1821 = vmand %vm1725, %vm1805
        %vm1822 = vmand %vm1726, %vm1806
        %vm1823 = vmand %vm1727, %vm1807
        %vm1824 = vmand %vm1728, %vm1808
        %vm1825 = vmand %vm1729, %vm1809
        %vm1826 = vmand %vm1730, %vm1810
        %vm1827 = vmand %vm1731, %vm1811
        %vm1828 = vmand %vm1732, %vm1812
        %vm1829 = vmand %vm1733, %vm1813
        %vm1830 = vmand %vm1734, %vm1814
        %vm1831 = vmand %vm1735, %vm1815
        %vm1832 = vmand %vm1736, %vm1816
        %vm1833 = vmand %vm1737, %vm1817
        %vm1834 = vmand %vm1738, %vm1818
        %vm1835 = vmand %vm1739, %vm1819
        %vm1836 = vmand %vm1740, %vm1820
        %vm1837 = vcmp.lt.f32.partialorder %v550, 1.0
        %vm1838 = vcmp.lt.f32.partialorder %v551, 1.0
        %vm1839 = vcmp.lt.f32.partialorder %v552, 1.0
        %vm1840 = vcmp.lt.f32.partialorder %v553, 1.0
        %vm1841 = vcmp.lt.f32.partialorder %v554, 1.0
        %vm1842 = vcmp.lt.f32.partialorder %v555, 1.0
        %vm1843 = vcmp.lt.f32.partialorder %v556, 1.0
        %vm1844 = vcmp.lt.f32.partialorder %v557, 1.0
        %vm1845 = vcmp.lt.f32.partialorder %v558, 1.0
        %vm1846 = vcmp.lt.f32.partialorder %v559, 1.0
        %vm1847 = vcmp.lt.f32.partialorder %v560, 1.0
        %vm1848 = vcmp.lt.f32.partialorder %v561, 1.0
        %vm1849 = vcmp.lt.f32.partialorder %v562, 1.0
        %vm1850 = vcmp.lt.f32.partialorder %v563, 1.0
        %vm1851 = vcmp.lt.f32.partialorder %v564, 1.0
        %vm1852 = vcmp.lt.f32.partialorder %v565, 1.0
        %v1853 = vsel %vm1837, 1, 0
        %v1854 = vsel %vm1838, 1, 0
        %v1855 = vsel %vm1839, 1, 0
        %v1856 = vsel %vm1840, 1, 0
        %v1857 = vsel %vm1841, 1, 0
        %v1858 = vsel %vm1842, 1, 0
        %v1859 = vsel %vm1843, 1, 0
        %v1860 = vsel %vm1844, 1, 0
        %v1861 = vsel %vm1845, 1, 0
        %v1862 = vsel %vm1846, 1, 0
        %v1863 = vsel %vm1847, 1, 0
        %v1864 = vsel %vm1848, 1, 0
        %v1865 = vsel %vm1849, 1, 0
        %v1866 = vsel %vm1850, 1, 0
        %v1867 = vsel %vm1851, 1, 0
        %v1868 = vsel %vm1852, 1, 0
        %1869 = vrot.lane.b32.xlu0 %v1853, 1
        %v1870 = vpop.permute.xlu0 %1869
        %1871 = vrot.lane.b32.xlu0 %v1854, 1
        %v1872 = vpop.permute.xlu0 %1871
        %1873 = vrot.lane.b32.xlu0 %v1855, 1
        %v1874 = vpop.permute.xlu0 %1873
        %1875 = vrot.lane.b32.xlu0 %v1856, 1
        %v1876 = vpop.permute.xlu0 %1875
        %1877 = vrot.lane.b32.xlu0 %v1857, 1
        %v1878 = vpop.permute.xlu0 %1877
        %1879 = vrot.lane.b32.xlu0 %v1858, 1
        %v1880 = vpop.permute.xlu0 %1879
        %1881 = vrot.lane.b32.xlu0 %v1859, 1
        %v1882 = vpop.permute.xlu0 %1881
        %1883 = vrot.lane.b32.xlu0 %v1860, 1
        %v1884 = vpop.permute.xlu0 %1883
        %1885 = vrot.lane.b32.xlu0 %v1861, 1
        %v1886 = vpop.permute.xlu0 %1885
        %1887 = vrot.lane.b32.xlu0 %v1862, 1
        %v1888 = vpop.permute.xlu0 %1887
        %1889 = vrot.lane.b32.xlu0 %v1863, 1
        %v1890 = vpop.permute.xlu0 %1889
        %1891 = vrot.lane.b32.xlu0 %v1864, 1
        %v1892 = vpop.permute.xlu0 %1891
        %1893 = vrot.lane.b32.xlu0 %v1865, 1
        %v1894 = vpop.permute.xlu0 %1893
        %1895 = vrot.lane.b32.xlu0 %v1866, 1
        %v1896 = vpop.permute.xlu0 %1895
        %1897 = vrot.lane.b32.xlu0 %v1867, 1
        %v1898 = vpop.permute.xlu0 %1897
        %1899 = vrot.lane.b32.xlu0 %v1868, 1
        %v1900 = vpop.permute.xlu0 %1899
        %vm1901 = vcmp.ne.s32.totalorder %v1870, 0
        %vm1902 = vcmp.ne.s32.totalorder %v1872, 0
        %vm1903 = vcmp.ne.s32.totalorder %v1874, 0
        %vm1904 = vcmp.ne.s32.totalorder %v1876, 0
        %vm1905 = vcmp.ne.s32.totalorder %v1878, 0
        %vm1906 = vcmp.ne.s32.totalorder %v1880, 0
        %vm1907 = vcmp.ne.s32.totalorder %v1882, 0
        %vm1908 = vcmp.ne.s32.totalorder %v1884, 0
        %vm1909 = vcmp.ne.s32.totalorder %v1886, 0
        %vm1910 = vcmp.ne.s32.totalorder %v1888, 0
        %vm1911 = vcmp.ne.s32.totalorder %v1890, 0
        %vm1912 = vcmp.ne.s32.totalorder %v1892, 0
        %vm1913 = vcmp.ne.s32.totalorder %v1894, 0
        %vm1914 = vcmp.ne.s32.totalorder %v1896, 0
        %vm1915 = vcmp.ne.s32.totalorder %v1898, 0
        %vm1916 = vcmp.ne.s32.totalorder %v1900, 0
        %vm1917 = vmand %vm1821, %vm1901
        %vm1918 = vmand %vm1822, %vm1902
        %vm1919 = vmand %vm1823, %vm1903
        %vm1920 = vmand %vm1824, %vm1904
        %vm1921 = vmand %vm1825, %vm1905
        %vm1922 = vmand %vm1826, %vm1906
        %vm1923 = vmand %vm1827, %vm1907
        %vm1924 = vmand %vm1828, %vm1908
        %vm1925 = vmand %vm1829, %vm1909
        %vm1926 = vmand %vm1830, %vm1910
        %vm1927 = vmand %vm1831, %vm1911
        %vm1928 = vmand %vm1832, %vm1912
        %vm1929 = vmand %vm1833, %vm1913
        %vm1930 = vmand %vm1834, %vm1914
        %vm1931 = vmand %vm1835, %vm1915
        %vm1932 = vmand %vm1836, %vm1916
        %v1933 = vsel %vm1917, 1, 0
        %v1934 = vsel %vm1918, 1, 0
        %v1935 = vsel %vm1919, 1, 0
        %v1936 = vsel %vm1920, 1, 0
        %v1937 = vsel %vm1921, 1, 0
        %v1938 = vsel %vm1922, 1, 0
        %v1939 = vsel %vm1923, 1, 0
        %v1940 = vsel %vm1924, 1, 0
        %v1941 = vsel %vm1925, 1, 0
        %v1942 = vsel %vm1926, 1, 0
        %v1943 = vsel %vm1927, 1, 0
        %v1944 = vsel %vm1928, 1, 0
        %v1945 = vsel %vm1929, 1, 0
        %v1946 = vsel %vm1930, 1, 0
        %v1947 = vsel %vm1931, 1, 0
        %v1948 = vsel %vm1932, 1, 0
        %v1949 = vcvt.s32.f32 %v1933
        %v1950 = vcvt.s32.f32 %v1934
        %v1951 = vcvt.s32.f32 %v1935
        %v1952 = vcvt.s32.f32 %v1936
        %v1953 = vcvt.s32.f32 %v1937
        %v1954 = vcvt.s32.f32 %v1938
        %v1955 = vcvt.s32.f32 %v1939
        %v1956 = vcvt.s32.f32 %v1940
        %v1957 = vcvt.s32.f32 %v1941
        %v1958 = vcvt.s32.f32 %v1942
        %v1959 = vcvt.s32.f32 %v1943
        %v1960 = vcvt.s32.f32 %v1944
        %v1961 = vcvt.s32.f32 %v1945
        %v1962 = vcvt.s32.f32 %v1946
        %v1963 = vcvt.s32.f32 %v1947
        %v1964 = vcvt.s32.f32 %v1948
        %1981 = vrot.lane.b32.xlu0 %v1949, 126
        %v1982 = vpop.permute.xlu0 %1981
        %1983 = vrot.lane.b32.xlu0 %v1950, 126
        %v1984 = vpop.permute.xlu0 %1983
        %1985 = vrot.lane.b32.xlu0 %v1951, 126
        %v1986 = vpop.permute.xlu0 %1985
        %1987 = vrot.lane.b32.xlu0 %v1952, 126
        %v1988 = vpop.permute.xlu0 %1987
        %1989 = vrot.lane.b32.xlu0 %v1953, 126
        %v1990 = vpop.permute.xlu0 %1989
        %1991 = vrot.lane.b32.xlu0 %v1954, 126
        %v1992 = vpop.permute.xlu0 %1991
        %1993 = vrot.lane.b32.xlu0 %v1955, 126
        %v1994 = vpop.permute.xlu0 %1993
        %1995 = vrot.lane.b32.xlu0 %v1956, 126
        %v1996 = vpop.permute.xlu0 %1995
        %1997 = vrot.lane.b32.xlu0 %v1957, 126
        %v1998 = vpop.permute.xlu0 %1997
        %1999 = vrot.lane.b32.xlu0 %v1958, 126
        %v2000 = vpop.permute.xlu0 %1999
        %2001 = vrot.lane.b32.xlu0 %v1959, 126
        %v2002 = vpop.permute.xlu0 %2001
        %2003 = vrot.lane.b32.xlu0 %v1960, 126
        %v2004 = vpop.permute.xlu0 %2003
        %2005 = vrot.lane.b32.xlu0 %v1961, 126
        %v2006 = vpop.permute.xlu0 %2005
        %2007 = vrot.lane.b32.xlu0 %v1962, 126
        %v2008 = vpop.permute.xlu0 %2007
        %2009 = vrot.lane.b32.xlu0 %v1963, 126
        %v2010 = vpop.permute.xlu0 %2009
        %2011 = vrot.lane.b32.xlu0 %v1964, 126
        %v2012 = vpop.permute.xlu0 %2011
        %vm2029 = vcmask 7168
        %2030 = vst.msk [vmem:[%s302] sm:$0xff] %vm2029, %v1982
        %2031 = vst.msk [vmem:[%s302 + $0x8] sm:$0xff] %vm2029, %v1984
        %2032 = vst.msk [vmem:[%s302 + $0x10] sm:$0xff] %vm2029, %v1986
        %2033 = vst.msk [vmem:[%s302 + $0x18] sm:$0xff] %vm2029, %v1988
        %2034 = vst.msk [vmem:[%s302 + $0x20] sm:$0xff] %vm2029, %v1990
        %2035 = vst.msk [vmem:[%s302 + $0x28] sm:$0xff] %vm2029, %v1992
        %2036 = vst.msk [vmem:[%s302 + $0x30] sm:$0xff] %vm2029, %v1994
        %2037 = vst.msk [vmem:[%s302 + $0x38] sm:$0xff] %vm2029, %v1996
        %2038 = vst.msk [vmem:[%s302 + $0x40] sm:$0xff] %vm2029, %v1998
        %2039 = vst.msk [vmem:[%s302 + $0x48] sm:$0xff] %vm2029, %v2000
        %2040 = vst.msk [vmem:[%s302 + $0x50] sm:$0xff] %vm2029, %v2002
        %2041 = vst.msk [vmem:[%s302 + $0x58] sm:$0xff] %vm2029, %v2004
        %2042 = vst.msk [vmem:[%s302 + $0x60] sm:$0xff] %vm2029, %v2006
        %2043 = vst.msk [vmem:[%s302 + $0x68] sm:$0xff] %vm2029, %v2008
        %2044 = vst.msk [vmem:[%s302 + $0x70] sm:$0xff] %vm2029, %v2010
        %2045 = vst.msk [vmem:[%s302 + $0x78] sm:$0xff] %vm2029, %v2012
      $region40: #{tpu_custom_call.1} parent=31 // pred_fallthru
        _
      %s2046 = smul.u32 16, %s22
      %p2047 = scmp.lt.s32.totalorder %s21, 3
      %s2048 = scalar_select %p2047, %s21, 3
      %p2049 = scmp.lt.s32.totalorder %s2046, 15
      %s2050 = scalar_select %p2049, %s2046, 15
      %s2051 = smul.addr %s2048, 16
      %s2052 = sadd.s32 %s2050, %s2051
      %s2053 = smul.addr %s2052, 8
      %s2054 = scalar_lea.vmem %s3, %s2053
      %s2055 = smul.u32 16, %s22
      %p2056 = scmp.lt.s32.totalorder %s21, 3
      %s2057 = scalar_select %p2056, %s21, 3
      %p2058 = scmp.lt.s32.totalorder %s2055, 15
      %s2059 = scalar_select %p2058, %s2055, 15
      %s2060 = smul.addr %s2057, 16
      %s2061 = sadd.s32 %s2059, %s2060
      %s2062 = smul.addr %s2061, 8
      %s2063 = scalar_lea.vmem %s4, %s2062
      // Predicated region
      $region41: #{tpu_custom_call.1} parent=31 // pred_check
        %p2064 = pneg %p132
      $region42: #{tpu_custom_call.1} parent=31 // pred_check_branch
        %2066 = sbr.rel (%p2064) target = $region44
      $region43: #{tpu_custom_call.1} parent=31 // pred_region
        %s2067 = smul.u32 16, %s22
      $region44: #{tpu_custom_call.1} parent=31 // pred_fallthru
        _
      // Predicated region
      $region45: #{tpu_custom_call.1} parent=31 // pred_check
        %p2068 = pneg %p160
      $region46: #{tpu_custom_call.1} parent=31 // pred_check_branch
        %2070 = sbr.rel (%p2068) target = $region48
      $region47: #{tpu_custom_call.1} parent=31 // pred_region
        %s2071 = smul.u32 16, %s22
      $region48: #{tpu_custom_call.1} parent=31 // pred_fallthru
        _
    $region32: #{tpu_custom_call.1} parent=5 // pred_fallthru
      _
    %p2072 = scmp.le.s32.totalorder 2, %s11
    // Predicated region
    $region49: #{tpu_custom_call.1} parent=5 // pred_check
      %p2073 = pneg %p2072
    $region50: #{tpu_custom_call.1} parent=5 // pred_check_branch
      %2075 = sbr.rel (%p2073) target = $region52
    $region51: #{tpu_custom_call.1} parent=5 // pred_region
      %s2076 = ssub.s32 %s11, 2
      // Predicated region
      $region53: #{tpu_custom_call.1} parent=51 // pred_check
        %p2077 = pneg %p138
      $region54: #{tpu_custom_call.1} parent=51 // pred_check_branch
        %2079 = sbr.rel (%p2077) target = $region56
      $region55: #{tpu_custom_call.1} parent=51 // pred_region
        %s2080 = smul.u32 16, %s25
        %p2081 = scmp.lt.s32.totalorder %s24, 3
        %s2082 = scalar_select %p2081, %s24, 3
        %p2083 = scmp.lt.s32.totalorder %s2080, 15
        %s2084 = scalar_select %p2083, %s2080, 15
        %s2085 = smul.addr %s2082, 16
        %s2086 = sadd.s32 %s2084, %s2085
        %s2087 = smul.addr %s2086, 8
        %s2088 = scalar_lea.vmem %s3, %s2087
      $region56: #{tpu_custom_call.1} parent=51 // pred_fallthru
        _
      // Predicated region
      $region57: #{tpu_custom_call.1} parent=51 // pred_check
        %p2089 = pneg %p166
      $region58: #{tpu_custom_call.1} parent=51 // pred_check_branch
        %2091 = sbr.rel (%p2089) target = $region60
      $region59: #{tpu_custom_call.1} parent=51 // pred_region
        %s2092 = smul.u32 16, %s25
        %p2093 = scmp.lt.s32.totalorder %s24, 3
        %s2094 = scalar_select %p2093, %s24, 3
        %p2095 = scmp.lt.s32.totalorder %s2092, 15
        %s2096 = scalar_select %p2095, %s2092, 15
        %s2097 = smul.addr %s2094, 16
        %s2098 = sadd.s32 %s2096, %s2097
        %s2099 = smul.addr %s2098, 8
        %s2100 = scalar_lea.vmem %s4, %s2099
      $region60: #{tpu_custom_call.1} parent=51 // pred_fallthru
        _
    $region52: #{tpu_custom_call.1} parent=5 // pred_fallthru
      _
  $region6: #{tpu_custom_call.1} parent=0 // loop_footer
    %s15 = sadd.s32 1, %s11
  $region7: #{tpu_custom_call.1} parent=0 // loop_footer_branch
    %10 = sbr.rel target = $region3
  $region8: #{tpu_custom_call.1} parent=0 // loop_exit
    _

</llo_original>
